<compile_context>
chip_gen: v6e
topology: v6e:2x2x1
jax: 0.10.0
libtpu: 0.0.40
codegen_flags: <defaults>
</compile_context>

<pallas_src>
import math

import jax
import jax.numpy as jnp
from jax import lax
from jax.experimental import pallas as pl
from jax.experimental.pallas import tpu as pltpu


# ---------------------------------------------------------------------------
# Fused kernel: upconv (+interleave +pad +concat, folded into matrices)
#               -> Conv(3,1)+BN+ReLU x2 -> eca channel attention.
# Activation layout: (N, H, L) with L = W * C packed on the 128-lane axis.
# ---------------------------------------------------------------------------
def up_block_fused_kernel(x1_ref, x2_ref, mup_ref, bup_ref,
                          w1u_ref, w1s_ref, b1_ref, g1_ref, be1_ref,
                          w2p_ref, b2_ref, g2_ref, be2_ref,
                          red_ref, exp_ref, att_ref, o_ref):
    N, H2, L = o_ref.shape
    H1 = x1_ref.shape[1]
    C = red_ref.shape[1]
    W2 = L // C
    ht = (H2 - H1) // 2
    hb = (H2 - H1) - ht
    f32 = jnp.float32

    def mm(x, w_ref):
        # MXU matmul, bf16 operands, f32 accumulation.  The reshape only merges leading /
        # sublane dims (the 128-wide lane axis is untouched), so it is a cheap collapse.
        s = x.shape
        y = jnp.dot(x.reshape(-1, s[-1]).astype(jnp.bfloat16), w_ref[...],
                    preferred_element_type=f32)
        return y.reshape(s[:-1] + (w_ref.shape[1],))

    zrow = jnp.zeros((N, 1, L), f32)

    def conv_h(t, b_lane):
        # t: (N, H2, 3L) = the three H-taps packed side by side (one wide matmul upstream).
        # y[h] = tap0 @ x[h-1] + tap1 @ x[h] + tap2 @ x[h+1]  (zero 'same' padding along H).
        y = t[:, :, L:2 * L]
        y = y + jnp.concatenate([zrow, t[:, :-1, 0:L]], axis=1)
        y = y + jnp.concatenate([t[:, 1:, 2 * L:3 * L], zrow], axis=1)
        return y + b_lane

    inv_cnt = 1.0 / float(N * H2 * W2)

    def bn_relu(y, g_ref, be_ref):
        # Training-mode BatchNorm (global batch statistics, biased variance, eps=1e-5),
        # folded to a single per-lane multiply-add; stats via one-pass E[x^2]-E[x]^2.
        flat = y.reshape(-1, L)
        s = jnp.sum(flat, axis=0, keepdims=True)                  # (1, L)
        ss = jnp.sum(flat * flat, axis=0, keepdims=True)          # (1, L)
        mean_c = jnp.dot(s, red_ref[...], preferred_element_type=f32) * inv_cnt   # (1, C)
        msq_c = jnp.dot(ss, red_ref[...], preferred_element_type=f32) * inv_cnt
        var_c = jnp.maximum(msq_c - mean_c * mean_c, 0.0)
        scale_c = g_ref[...] * lax.rsqrt(var_c + 1e-5)
        bias_c = be_ref[...] - mean_c * scale_c
        scale_l = jnp.dot(scale_c, exp_ref[...], preferred_element_type=f32)      # (1, L)
        bias_l = jnp.dot(bias_c, exp_ref[...], preferred_element_type=f32)
        return jnp.maximum(y * scale_l + bias_l, 0.0)

    # ConvTranspose2d + even/odd interleave + F.pad(W): one lane->lane matmul + masked bias.
    up = mm(x1_ref[...], mup_ref) + bup_ref[...]                  # (N, H1, L)
    if ht or hb:                                                  # F.pad along H (static sizes)
        parts = []
        if ht:
            parts.append(jnp.zeros((N, ht, L), f32))
        parts.append(up)
        if hb:
            parts.append(jnp.zeros((N, hb, L), f32))
        up = jnp.concatenate(parts, axis=1)                       # (N, H2, L)

    # double_conv: the channel concat [up | x2] is folded into two packed weight matrices.
    t = mm(up, w1u_ref) + mm(x2_ref[...], w1s_ref)                # (N, H2, 3L)
    y = bn_relu(conv_h(t, b1_ref[...]), g1_ref, be1_ref)
    t = mm(y, w2p_ref)                                            # (N, H2, 3L)
    y = bn_relu(conv_h(t, b2_ref[...]), g2_ref, be2_ref)

    # eca_block: global average pool -> 1D channel conv (band matrix) -> sigmoid -> rescale.
    pooled_c = jnp.dot(jnp.sum(y, axis=1), red_ref[...],
                       preferred_element_type=f32) * (1.0 / float(H2 * W2))        # (N, C)
    att_c = jax.nn.sigmoid(jnp.dot(pooled_c, att_ref[...], preferred_element_type=f32))
    att_l = jnp.dot(att_c, exp_ref[...], preferred_element_type=f32)               # (N, L)
    o_ref[...] = y * att_l[:, None, :]


# ---------------------------------------------------------------------------
# Wrapper (NCHW in / NCHW out, like the PyTorch module)
# ---------------------------------------------------------------------------
def up_block_forward(x1, x2, params):
    N, Cin, H1, W1 = x1.shape
    _, Cout, H2, W2 = x2.shape
    assert Cin == 2 * Cout
    f32, bf16 = jnp.float32, jnp.bfloat16

    L = W2 * Cout
    Wup = 2 * W1 - 1
    dh, dw = H2 - H1, W2 - Wup
    wl = dw // 2

    # NHWC, then pack (W, C) onto the lane axis (lane index = w*C + c).
    x1n = jnp.transpose(x1, (0, 2, 3, 1)).astype(f32).reshape(N, H1, W1 * Cin)
    x2n = jnp.transpose(x2, (0, 2, 3, 1)).astype(f32).reshape(N, H2, L)

    # --- fold ConvTranspose2d(1x3, stride (1,2), pad (0,1)) + interleave + W-pad into M_up ---
    wt = params["wt"].astype(f32)                                   # (Cin, Cout, 1, 3)
    cols = jnp.arange(W2)
    m_up = jnp.zeros((W1 * Cin, L), f32)
    for kw in range(3):
        wo = 2 * jnp.arange(W1) - 1 + kw                            # output column per input col
        valid = (wo >= 0) & (wo < Wup)
        sel = jnp.where(valid[:, None], cols[None, :] == (wl + wo)[:, None], False).astype(f32)
        m_up = m_up + jnp.kron(sel, wt[:, :, 0, kw])                # (W1*Cin, W2*Cout)
    wmask = ((cols >= wl) & (cols < wl + Wup)).astype(f32)
    b_up = (wmask[:, None] * params["bt"].astype(f32)[None, :]).reshape(1, L)

    # --- block-diagonal, tap-packed conv weights (one wide MXU matmul per conv input) ---
    eye_w = jnp.eye(W2, dtype=f32)

    def packed(wk, lo, hi):
        # taps k = 0,1,2 side by side -> (W2*(hi-lo), 3*W2*Cout)
        return jnp.concatenate(
            [jnp.kron(eye_w, jnp.transpose(wk[:, lo:hi, k, 0])) for k in range(3)], axis=1)

    w1 = params["w1"].astype(f32)                                   # (Cout, 2*Cout, 3, 1)
    w2 = params["w2"].astype(f32)                                   # (Cout, Cout, 3, 1)
    w1_up = packed(w1, 0, Cout)                                     # acts on the upsampled half
    w1_skip = packed(w1, Cout, 2 * Cout)                            # acts on the x2 (skip) half
    w2_pk = packed(w2, 0, Cout)

    b1 = jnp.tile(params["b1"].astype(f32), W2).reshape(1, L)
    b2 = jnp.tile(params["b2"].astype(f32), W2).reshape(1, L)
    g1 = params["g1"].astype(f32).reshape(1, Cout)
    be1 = params["be1"].astype(f32).reshape(1, Cout)
    g2 = params["g2"].astype(f32).reshape(1, Cout)
    be2 = params["be2"].astype(f32).reshape(1, Cout)

    # lane<->channel reduce / broadcast matrices (lane l = w*Cout + c  ->  channel c).
    red = jnp.kron(jnp.ones((W2, 1), f32), jnp.eye(Cout, dtype=f32))   # (L, Cout)
    expd = red.T                                                       # (Cout, L)

    # eca 1D conv over channels as a (C, C) band matrix.
    wc = params["wc"][0, 0].astype(f32)
    k = wc.shape[0]
    pad = (k - 1) // 2
    idx = jnp.arange(Cout)
    diff = idx[:, None] - idx[None, :]
    wc_band = jnp.where(jnp.abs(diff) <= pad, wc[jnp.clip(diff + pad, 0, k - 1)], 0.0)

    vmem = pl.BlockSpec(memory_space=pltpu.MemorySpace.VMEM)
    out = pl.pallas_call(
        up_block_fused_kernel,
        out_shape=jax.ShapeDtypeStruct((N, H2, L), f32),
        in_specs=[vmem] * 16,
        out_specs=vmem,
        compiler_params=pltpu.CompilerParams(vmem_limit_bytes=32 * 1024 * 1024),
    )(x1n, x2n, m_up.astype(bf16), b_up,
      w1_up.astype(bf16), w1_skip.astype(bf16), b1, g1, be1,
      w2_pk.astype(bf16), b2, g2, be2, red, expd, wc_band)

    return jnp.transpose(out.reshape(N, H2, W2, Cout), (0, 3, 1, 2))   # back to NCHW


# ---------------------------------------------------------------------------
# Pure-JAX reference (mirrors the PyTorch forward) for a sanity check.
# ---------------------------------------------------------------------------
def up_block_reference(x1, x2, params):
    wt, bt = params["wt"], params["bt"]
    w_conv = jnp.transpose(wt, (1, 0, 2, 3))[:, :, ::-1, ::-1]
    up = lax.conv_general_dilated(
        x1, w_conv, window_strides=(1, 1), padding=((0, 0), (1, 1)),
        lhs_dilation=(1, 2), dimension_numbers=("NCHW", "OIHW", "NCHW"),
    ) + bt.reshape(1, -1, 1, 1)
    dh = x2.shape[2] - up.shape[2]
    dw = x2.shape[3] - up.shape[3]
    up = jnp.pad(up, ((0, 0), (0, 0), (dh // 2, dh - dh // 2), (dw // 2, dw - dw // 2)))
    x = jnp.concatenate([up, x2], axis=1)

    def conv_bn_relu(t, w, b, g, be):
        y = lax.conv_general_dilated(
            t, w, window_strides=(1, 1), padding=((1, 1), (0, 0)),
            dimension_numbers=("NCHW", "OIHW", "NCHW")) + b.reshape(1, -1, 1, 1)
        m = y.mean(axis=(0, 2, 3), keepdims=True)
        v = ((y - m) ** 2).mean(axis=(0, 2, 3), keepdims=True)
        y = (y - m) / jnp.sqrt(v + 1e-5) * g.reshape(1, -1, 1, 1) + be.reshape(1, -1, 1, 1)
        return jnp.maximum(y, 0.0)

    x = conv_bn_relu(x, params["w1"], params["b1"], params["g1"], params["be1"])
    x = conv_bn_relu(x, params["w2"], params["b2"], params["g2"], params["be2"])

    p = x.mean(axis=(2, 3))                              # (N, C)
    k = params["wc"].shape[-1]
    pad = (k - 1) // 2
    z = lax.conv_general_dilated(
        p[:, None, :], params["wc"], window_strides=(1,), padding=((pad, pad),),
        dimension_numbers=("NCH", "OIH", "NCH"))[:, 0, :]
    return x * jax.nn.sigmoid(z)[:, :, None, None]


if __name__ == "__main__":
    N, in_ch, out_ch = 2, 16, 8
    H1, W1 = 4, 8           # x1 (main stream):       (N, in_ch, H1, W1)
    H2, W2 = 4, 16          # x2 (skip connection):   (N, out_ch, H2, W2) -- satisfies module asserts

    key = jax.random.PRNGKey(0)
    keys = jax.random.split(key, 16)
    x1 = jax.random.normal(keys[0], (N, in_ch, H1, W1), jnp.float32)
    x2 = jax.random.normal(keys[1], (N, out_ch, H2, W2), jnp.float32)

    # eca kernel size per the module's formula (== 3 for out_ch=8)
    k_eca = int(abs((math.log(out_ch, 2) + 1) / 2))
    k_eca = k_eca if k_eca % 2 else k_eca + 1

    params = {
        "wt":  0.3 * jax.random.normal(keys[2], (in_ch, out_ch, 1, 3), jnp.float32),   # ConvTranspose2d weight
        "bt":  0.1 * jax.random.normal(keys[3], (out_ch,), jnp.float32),
        "w1":  0.25 * jax.random.normal(keys[4], (out_ch, 2 * out_ch, 3, 1), jnp.float32),
        "b1":  0.1 * jax.random.normal(keys[5], (out_ch,), jnp.float32),
        "g1":  1.0 + 0.1 * jax.random.normal(keys[6], (out_ch,), jnp.float32),
        "be1": 0.1 * jax.random.normal(keys[7], (out_ch,), jnp.float32),
        "w2":  0.25 * jax.random.normal(keys[8], (out_ch, out_ch, 3, 1), jnp.float32),
        "b2":  0.1 * jax.random.normal(keys[9], (out_ch,), jnp.float32),
        "g2":  1.0 + 0.1 * jax.random.normal(keys[10], (out_ch,), jnp.float32),
        "be2": 0.1 * jax.random.normal(keys[11], (out_ch,), jnp.float32),
        "wc":  0.5 * jax.random.normal(keys[12], (1, 1, k_eca), jnp.float32),           # eca Conv1d weight
    }

    out = jax.block_until_ready(up_block_forward(x1, x2, params))
    ref = jax.block_until_ready(up_block_reference(x1, x2, params))
    assert out.shape == (N, out_ch, H2, W2), out.shape
    # loose tolerance: both paths use bf16-class MXU precision (kernel: explicit bf16 operands
    # with f32 accumulation; reference: TPU default f32 conv precision).
    assert jnp.allclose(out, ref, atol=1e-1, rtol=1e-1), float(jnp.max(jnp.abs(out - ref)))
    print("KERNEL_OK")
</pallas_src>

<mosaic_0001>
module attributes {stable_mosaic.version = 11 : i64} {
  func.func @up_block_fused_kernel(%arg0: memref<2x4x128xf32, #tpu.memory_space<vmem>>, %arg1: memref<2x4x128xf32, #tpu.memory_space<vmem>>, %arg2: memref<128x128xbf16, #tpu.memory_space<vmem>>, %arg3: memref<1x128xf32, #tpu.memory_space<vmem>>, %arg4: memref<128x384xbf16, #tpu.memory_space<vmem>>, %arg5: memref<128x384xbf16, #tpu.memory_space<vmem>>, %arg6: memref<1x128xf32, #tpu.memory_space<vmem>>, %arg7: memref<1x8xf32, #tpu.memory_space<vmem>>, %arg8: memref<1x8xf32, #tpu.memory_space<vmem>>, %arg9: memref<128x384xbf16, #tpu.memory_space<vmem>>, %arg10: memref<1x128xf32, #tpu.memory_space<vmem>>, %arg11: memref<1x8xf32, #tpu.memory_space<vmem>>, %arg12: memref<1x8xf32, #tpu.memory_space<vmem>>, %arg13: memref<128x8xf32, #tpu.memory_space<vmem>>, %arg14: memref<8x128xf32, #tpu.memory_space<vmem>>, %arg15: memref<8x8xf32, #tpu.memory_space<vmem>>, %arg16: memref<2x4x128xf32, #tpu.memory_space<vmem>>) attributes {dimension_semantics = [], scalar_prefetch = 0 : i64, scratch_operands = 0 : i64, tpu.core_type = #tpu.core_type<tc>} {
    %cst = arith.constant 0.000000e+00 : f32
    %0 = vector.broadcast %cst : f32 to vector<2x1x128xf32>
    %c0 = arith.constant 0 : index
    %c0_0 = arith.constant 0 : index
    %c0_1 = arith.constant 0 : index
    %1 = vector.load %arg0[%c0, %c0_0, %c0_1] : memref<2x4x128xf32, #tpu.memory_space<vmem>>, vector<2x4x128xf32>
    %2 = vector.shape_cast %1 : vector<2x4x128xf32> to vector<8x128xf32>
    %3 = arith.truncf %2 : vector<8x128xf32> to vector<8x128xbf16>
    %c0_2 = arith.constant 0 : index
    %c0_3 = arith.constant 0 : index
    %4 = vector.load %arg2[%c0_2, %c0_3] : memref<128x128xbf16, #tpu.memory_space<vmem>>, vector<128x128xbf16>
    %cst_4 = arith.constant dense<0.000000e+00> : vector<8x128xf32>
    %5 = tpu.matmul %3, %4, %cst_4 {dimension_numbers = #tpu.dot_dimension_numbers<[1], [0], [0], [1], [0, 0, 1, 1], [], []>} : vector<8x128xbf16>, vector<128x128xbf16>, vector<8x128xf32> -> vector<8x128xf32>
    %6 = vector.shape_cast %5 : vector<8x128xf32> to vector<2x4x128xf32>
    %c0_5 = arith.constant 0 : index
    %c0_6 = arith.constant 0 : index
    %7 = vector.load %arg3[%c0_5, %c0_6] : memref<1x128xf32, #tpu.memory_space<vmem>>, vector<1x128xf32>
    %8 = vector.shape_cast %7 : vector<1x128xf32> to vector<1x1x128xf32>
    %9 = vector.broadcast %8 : vector<1x1x128xf32> to vector<2x4x128xf32>
    %10 = arith.addf %6, %9 : vector<2x4x128xf32>
    %11 = vector.shape_cast %10 : vector<2x4x128xf32> to vector<8x128xf32>
    %12 = arith.truncf %11 : vector<8x128xf32> to vector<8x128xbf16>
    %c0_7 = arith.constant 0 : index
    %c0_8 = arith.constant 0 : index
    %13 = vector.load %arg4[%c0_7, %c0_8] : memref<128x384xbf16, #tpu.memory_space<vmem>>, vector<128x384xbf16>
    %cst_9 = arith.constant dense<0.000000e+00> : vector<8x384xf32>
    %14 = tpu.matmul %12, %13, %cst_9 {dimension_numbers = #tpu.dot_dimension_numbers<[1], [0], [0], [1], [0, 0, 1, 1], [], []>} : vector<8x128xbf16>, vector<128x384xbf16>, vector<8x384xf32> -> vector<8x384xf32>
    %15 = vector.shape_cast %14 : vector<8x384xf32> to vector<2x4x384xf32>
    %c0_10 = arith.constant 0 : index
    %c0_11 = arith.constant 0 : index
    %c0_12 = arith.constant 0 : index
    %16 = vector.load %arg1[%c0_10, %c0_11, %c0_12] : memref<2x4x128xf32, #tpu.memory_space<vmem>>, vector<2x4x128xf32>
    %17 = vector.shape_cast %16 : vector<2x4x128xf32> to vector<8x128xf32>
    %18 = arith.truncf %17 : vector<8x128xf32> to vector<8x128xbf16>
    %c0_13 = arith.constant 0 : index
    %c0_14 = arith.constant 0 : index
    %19 = vector.load %arg5[%c0_13, %c0_14] : memref<128x384xbf16, #tpu.memory_space<vmem>>, vector<128x384xbf16>
    %cst_15 = arith.constant dense<0.000000e+00> : vector<8x384xf32>
    %20 = tpu.matmul %18, %19, %cst_15 {dimension_numbers = #tpu.dot_dimension_numbers<[1], [0], [0], [1], [0, 0, 1, 1], [], []>} : vector<8x128xbf16>, vector<128x384xbf16>, vector<8x384xf32> -> vector<8x384xf32>
    %21 = vector.shape_cast %20 : vector<8x384xf32> to vector<2x4x384xf32>
    %22 = arith.addf %15, %21 : vector<2x4x384xf32>
    %c0_16 = arith.constant 0 : index
    %c0_17 = arith.constant 0 : index
    %23 = vector.load %arg6[%c0_16, %c0_17] : memref<1x128xf32, #tpu.memory_space<vmem>>, vector<1x128xf32>
    %24 = vector.extract_strided_slice %22 {offsets = [0, 0, 128], sizes = [2, 4, 128], strides = [1, 1, 1]} : vector<2x4x384xf32> to vector<2x4x128xf32>
    %25 = vector.extract_strided_slice %22 {offsets = [0, 0, 0], sizes = [2, 3, 128], strides = [1, 1, 1]} : vector<2x4x384xf32> to vector<2x3x128xf32>
    %26 = tpu.concatenate %0, %25 in 1 : vector<2x1x128xf32>, vector<2x3x128xf32> -> vector<2x4x128xf32>
    %27 = arith.addf %24, %26 : vector<2x4x128xf32>
    %28 = vector.extract_strided_slice %22 {offsets = [0, 1, 256], sizes = [2, 3, 128], strides = [1, 1, 1]} : vector<2x4x384xf32> to vector<2x3x128xf32>
    %29 = tpu.concatenate %28, %0 in 1 : vector<2x3x128xf32>, vector<2x1x128xf32> -> vector<2x4x128xf32>
    %30 = arith.addf %27, %29 : vector<2x4x128xf32>
    %31 = vector.shape_cast %23 : vector<1x128xf32> to vector<1x1x128xf32>
    %32 = vector.broadcast %31 : vector<1x1x128xf32> to vector<2x4x128xf32>
    %33 = arith.addf %30, %32 : vector<2x4x128xf32>
    %34 = vector.shape_cast %33 : vector<2x4x128xf32> to vector<8x128xf32>
    %cst_18 = arith.constant dense<0.000000e+00> : vector<128xf32>
    %35 = vector.multi_reduction <add>, %34, %cst_18 [0] : vector<8x128xf32> to vector<128xf32>
    %36 = vector.shape_cast %35 : vector<128xf32> to vector<1x128xf32>
    %37 = arith.mulf %34, %34 : vector<8x128xf32>
    %cst_19 = arith.constant dense<0.000000e+00> : vector<128xf32>
    %38 = vector.multi_reduction <add>, %37, %cst_19 [0] : vector<8x128xf32> to vector<128xf32>
    %39 = vector.shape_cast %38 : vector<128xf32> to vector<1x128xf32>
    %c0_20 = arith.constant 0 : index
    %c0_21 = arith.constant 0 : index
    %40 = vector.load %arg13[%c0_20, %c0_21] : memref<128x8xf32, #tpu.memory_space<vmem>>, vector<128x8xf32>
    %cst_22 = arith.constant dense<0.000000e+00> : vector<1x8xf32>
    %41 = tpu.matmul %36, %40, %cst_22 {dimension_numbers = #tpu.dot_dimension_numbers<[1], [0], [0], [1], [0, 0, 1, 1], [], []>} : vector<1x128xf32>, vector<128x8xf32>, vector<1x8xf32> -> vector<1x8xf32>
    %cst_23 = arith.constant 7.812500e-03 : f32
    %42 = vector.broadcast %cst_23 : f32 to vector<1x8xf32>
    %43 = arith.mulf %41, %42 : vector<1x8xf32>
    %c0_24 = arith.constant 0 : index
    %c0_25 = arith.constant 0 : index
    %44 = vector.load %arg13[%c0_24, %c0_25] : memref<128x8xf32, #tpu.memory_space<vmem>>, vector<128x8xf32>
    %cst_26 = arith.constant dense<0.000000e+00> : vector<1x8xf32>
    %45 = tpu.matmul %39, %44, %cst_26 {dimension_numbers = #tpu.dot_dimension_numbers<[1], [0], [0], [1], [0, 0, 1, 1], [], []>} : vector<1x128xf32>, vector<128x8xf32>, vector<1x8xf32> -> vector<1x8xf32>
    %cst_27 = arith.constant 7.812500e-03 : f32
    %46 = vector.broadcast %cst_27 : f32 to vector<1x8xf32>
    %47 = arith.mulf %45, %46 : vector<1x8xf32>
    %48 = arith.mulf %43, %43 : vector<1x8xf32>
    %49 = arith.subf %47, %48 : vector<1x8xf32>
    %cst_28 = arith.constant 0.000000e+00 : f32
    %50 = vector.broadcast %cst_28 : f32 to vector<1x8xf32>
    %51 = arith.maximumf %49, %50 : vector<1x8xf32>
    %c0_29 = arith.constant 0 : index
    %c0_30 = arith.constant 0 : index
    %52 = vector.load %arg7[%c0_29, %c0_30] : memref<1x8xf32, #tpu.memory_space<vmem>>, vector<1x8xf32>
    %cst_31 = arith.constant 9.99999974E-6 : f32
    %53 = vector.broadcast %cst_31 : f32 to vector<1x8xf32>
    %54 = arith.addf %51, %53 : vector<1x8xf32>
    %55 = math.rsqrt %54 : vector<1x8xf32>
    %56 = arith.mulf %52, %55 : vector<1x8xf32>
    %c0_32 = arith.constant 0 : index
    %c0_33 = arith.constant 0 : index
    %57 = vector.load %arg8[%c0_32, %c0_33] : memref<1x8xf32, #tpu.memory_space<vmem>>, vector<1x8xf32>
    %58 = arith.mulf %43, %56 : vector<1x8xf32>
    %59 = arith.subf %57, %58 : vector<1x8xf32>
    %c0_34 = arith.constant 0 : index
    %c0_35 = arith.constant 0 : index
    %60 = vector.load %arg14[%c0_34, %c0_35] : memref<8x128xf32, #tpu.memory_space<vmem>>, vector<8x128xf32>
    %cst_36 = arith.constant dense<0.000000e+00> : vector<1x128xf32>
    %61 = tpu.matmul %56, %60, %cst_36 {dimension_numbers = #tpu.dot_dimension_numbers<[1], [0], [0], [1], [0, 0, 1, 1], [], []>} : vector<1x8xf32>, vector<8x128xf32>, vector<1x128xf32> -> vector<1x128xf32>
    %c0_37 = arith.constant 0 : index
    %c0_38 = arith.constant 0 : index
    %62 = vector.load %arg14[%c0_37, %c0_38] : memref<8x128xf32, #tpu.memory_space<vmem>>, vector<8x128xf32>
    %cst_39 = arith.constant dense<0.000000e+00> : vector<1x128xf32>
    %63 = tpu.matmul %59, %62, %cst_39 {dimension_numbers = #tpu.dot_dimension_numbers<[1], [0], [0], [1], [0, 0, 1, 1], [], []>} : vector<1x8xf32>, vector<8x128xf32>, vector<1x128xf32> -> vector<1x128xf32>
    %64 = vector.shape_cast %61 : vector<1x128xf32> to vector<1x1x128xf32>
    %65 = vector.broadcast %64 : vector<1x1x128xf32> to vector<2x4x128xf32>
    %66 = arith.mulf %33, %65 : vector<2x4x128xf32>
    %67 = vector.shape_cast %63 : vector<1x128xf32> to vector<1x1x128xf32>
    %68 = vector.broadcast %67 : vector<1x1x128xf32> to vector<2x4x128xf32>
    %69 = arith.addf %66, %68 : vector<2x4x128xf32>
    %cst_40 = arith.constant 0.000000e+00 : f32
    %70 = vector.broadcast %cst_40 : f32 to vector<2x4x128xf32>
    %71 = arith.maximumf %69, %70 : vector<2x4x128xf32>
    %72 = vector.shape_cast %71 : vector<2x4x128xf32> to vector<8x128xf32>
    %73 = arith.truncf %72 : vector<8x128xf32> to vector<8x128xbf16>
    %c0_41 = arith.constant 0 : index
    %c0_42 = arith.constant 0 : index
    %74 = vector.load %arg9[%c0_41, %c0_42] : memref<128x384xbf16, #tpu.memory_space<vmem>>, vector<128x384xbf16>
    %cst_43 = arith.constant dense<0.000000e+00> : vector<8x384xf32>
    %75 = tpu.matmul %73, %74, %cst_43 {dimension_numbers = #tpu.dot_dimension_numbers<[1], [0], [0], [1], [0, 0, 1, 1], [], []>} : vector<8x128xbf16>, vector<128x384xbf16>, vector<8x384xf32> -> vector<8x384xf32>
    %76 = vector.shape_cast %75 : vector<8x384xf32> to vector<2x4x384xf32>
    %c0_44 = arith.constant 0 : index
    %c0_45 = arith.constant 0 : index
    %77 = vector.load %arg10[%c0_44, %c0_45] : memref<1x128xf32, #tpu.memory_space<vmem>>, vector<1x128xf32>
    %78 = vector.extract_strided_slice %76 {offsets = [0, 0, 128], sizes = [2, 4, 128], strides = [1, 1, 1]} : vector<2x4x384xf32> to vector<2x4x128xf32>
    %79 = vector.extract_strided_slice %76 {offsets = [0, 0, 0], sizes = [2, 3, 128], strides = [1, 1, 1]} : vector<2x4x384xf32> to vector<2x3x128xf32>
    %80 = tpu.concatenate %0, %79 in 1 : vector<2x1x128xf32>, vector<2x3x128xf32> -> vector<2x4x128xf32>
    %81 = arith.addf %78, %80 : vector<2x4x128xf32>
    %82 = vector.extract_strided_slice %76 {offsets = [0, 1, 256], sizes = [2, 3, 128], strides = [1, 1, 1]} : vector<2x4x384xf32> to vector<2x3x128xf32>
    %83 = tpu.concatenate %82, %0 in 1 : vector<2x3x128xf32>, vector<2x1x128xf32> -> vector<2x4x128xf32>
    %84 = arith.addf %81, %83 : vector<2x4x128xf32>
    %85 = vector.shape_cast %77 : vector<1x128xf32> to vector<1x1x128xf32>
    %86 = vector.broadcast %85 : vector<1x1x128xf32> to vector<2x4x128xf32>
    %87 = arith.addf %84, %86 : vector<2x4x128xf32>
    %88 = vector.shape_cast %87 : vector<2x4x128xf32> to vector<8x128xf32>
    %cst_46 = arith.constant dense<0.000000e+00> : vector<128xf32>
    %89 = vector.multi_reduction <add>, %88, %cst_46 [0] : vector<8x128xf32> to vector<128xf32>
    %90 = vector.shape_cast %89 : vector<128xf32> to vector<1x128xf32>
    %91 = arith.mulf %88, %88 : vector<8x128xf32>
    %cst_47 = arith.constant dense<0.000000e+00> : vector<128xf32>
    %92 = vector.multi_reduction <add>, %91, %cst_47 [0] : vector<8x128xf32> to vector<128xf32>
    %93 = vector.shape_cast %92 : vector<128xf32> to vector<1x128xf32>
    %c0_48 = arith.constant 0 : index
    %c0_49 = arith.constant 0 : index
    %94 = vector.load %arg13[%c0_48, %c0_49] : memref<128x8xf32, #tpu.memory_space<vmem>>, vector<128x8xf32>
    %cst_50 = arith.constant dense<0.000000e+00> : vector<1x8xf32>
    %95 = tpu.matmul %90, %94, %cst_50 {dimension_numbers = #tpu.dot_dimension_numbers<[1], [0], [0], [1], [0, 0, 1, 1], [], []>} : vector<1x128xf32>, vector<128x8xf32>, vector<1x8xf32> -> vector<1x8xf32>
    %cst_51 = arith.constant 7.812500e-03 : f32
    %96 = vector.broadcast %cst_51 : f32 to vector<1x8xf32>
    %97 = arith.mulf %95, %96 : vector<1x8xf32>
    %c0_52 = arith.constant 0 : index
    %c0_53 = arith.constant 0 : index
    %98 = vector.load %arg13[%c0_52, %c0_53] : memref<128x8xf32, #tpu.memory_space<vmem>>, vector<128x8xf32>
    %cst_54 = arith.constant dense<0.000000e+00> : vector<1x8xf32>
    %99 = tpu.matmul %93, %98, %cst_54 {dimension_numbers = #tpu.dot_dimension_numbers<[1], [0], [0], [1], [0, 0, 1, 1], [], []>} : vector<1x128xf32>, vector<128x8xf32>, vector<1x8xf32> -> vector<1x8xf32>
    %cst_55 = arith.constant 7.812500e-03 : f32
    %100 = vector.broadcast %cst_55 : f32 to vector<1x8xf32>
    %101 = arith.mulf %99, %100 : vector<1x8xf32>
    %102 = arith.mulf %97, %97 : vector<1x8xf32>
    %103 = arith.subf %101, %102 : vector<1x8xf32>
    %cst_56 = arith.constant 0.000000e+00 : f32
    %104 = vector.broadcast %cst_56 : f32 to vector<1x8xf32>
    %105 = arith.maximumf %103, %104 : vector<1x8xf32>
    %c0_57 = arith.constant 0 : index
    %c0_58 = arith.constant 0 : index
    %106 = vector.load %arg11[%c0_57, %c0_58] : memref<1x8xf32, #tpu.memory_space<vmem>>, vector<1x8xf32>
    %cst_59 = arith.constant 9.99999974E-6 : f32
    %107 = vector.broadcast %cst_59 : f32 to vector<1x8xf32>
    %108 = arith.addf %105, %107 : vector<1x8xf32>
    %109 = math.rsqrt %108 : vector<1x8xf32>
    %110 = arith.mulf %106, %109 : vector<1x8xf32>
    %c0_60 = arith.constant 0 : index
    %c0_61 = arith.constant 0 : index
    %111 = vector.load %arg12[%c0_60, %c0_61] : memref<1x8xf32, #tpu.memory_space<vmem>>, vector<1x8xf32>
    %112 = arith.mulf %97, %110 : vector<1x8xf32>
    %113 = arith.subf %111, %112 : vector<1x8xf32>
    %c0_62 = arith.constant 0 : index
    %c0_63 = arith.constant 0 : index
    %114 = vector.load %arg14[%c0_62, %c0_63] : memref<8x128xf32, #tpu.memory_space<vmem>>, vector<8x128xf32>
    %cst_64 = arith.constant dense<0.000000e+00> : vector<1x128xf32>
    %115 = tpu.matmul %110, %114, %cst_64 {dimension_numbers = #tpu.dot_dimension_numbers<[1], [0], [0], [1], [0, 0, 1, 1], [], []>} : vector<1x8xf32>, vector<8x128xf32>, vector<1x128xf32> -> vector<1x128xf32>
    %c0_65 = arith.constant 0 : index
    %c0_66 = arith.constant 0 : index
    %116 = vector.load %arg14[%c0_65, %c0_66] : memref<8x128xf32, #tpu.memory_space<vmem>>, vector<8x128xf32>
    %cst_67 = arith.constant dense<0.000000e+00> : vector<1x128xf32>
    %117 = tpu.matmul %113, %116, %cst_67 {dimension_numbers = #tpu.dot_dimension_numbers<[1], [0], [0], [1], [0, 0, 1, 1], [], []>} : vector<1x8xf32>, vector<8x128xf32>, vector<1x128xf32> -> vector<1x128xf32>
    %118 = vector.shape_cast %115 : vector<1x128xf32> to vector<1x1x128xf32>
    %119 = vector.broadcast %118 : vector<1x1x128xf32> to vector<2x4x128xf32>
    %120 = arith.mulf %87, %119 : vector<2x4x128xf32>
    %121 = vector.shape_cast %117 : vector<1x128xf32> to vector<1x1x128xf32>
    %122 = vector.broadcast %121 : vector<1x1x128xf32> to vector<2x4x128xf32>
    %123 = arith.addf %120, %122 : vector<2x4x128xf32>
    %cst_68 = arith.constant 0.000000e+00 : f32
    %124 = vector.broadcast %cst_68 : f32 to vector<2x4x128xf32>
    %125 = arith.maximumf %123, %124 : vector<2x4x128xf32>
    %cst_69 = arith.constant dense<0.000000e+00> : vector<2x128xf32>
    %126 = vector.multi_reduction <add>, %125, %cst_69 [1] : vector<2x4x128xf32> to vector<2x128xf32>
    %c0_70 = arith.constant 0 : index
    %c0_71 = arith.constant 0 : index
    %127 = vector.load %arg13[%c0_70, %c0_71] : memref<128x8xf32, #tpu.memory_space<vmem>>, vector<128x8xf32>
    %cst_72 = arith.constant dense<0.000000e+00> : vector<2x8xf32>
    %128 = tpu.matmul %126, %127, %cst_72 {dimension_numbers = #tpu.dot_dimension_numbers<[1], [0], [0], [1], [0, 0, 1, 1], [], []>} : vector<2x128xf32>, vector<128x8xf32>, vector<2x8xf32> -> vector<2x8xf32>
    %cst_73 = arith.constant 1.562500e-02 : f32
    %129 = vector.broadcast %cst_73 : f32 to vector<2x8xf32>
    %130 = arith.mulf %128, %129 : vector<2x8xf32>
    %c0_74 = arith.constant 0 : index
    %c0_75 = arith.constant 0 : index
    %131 = vector.load %arg15[%c0_74, %c0_75] : memref<8x8xf32, #tpu.memory_space<vmem>>, vector<8x8xf32>
    %cst_76 = arith.constant dense<0.000000e+00> : vector<2x8xf32>
    %132 = tpu.matmul %130, %131, %cst_76 {dimension_numbers = #tpu.dot_dimension_numbers<[1], [0], [0], [1], [0, 0, 1, 1], [], []>} : vector<2x8xf32>, vector<8x8xf32>, vector<2x8xf32> -> vector<2x8xf32>
    %133 = arith.negf %132 : vector<2x8xf32>
    %134 = math.exp %133 : vector<2x8xf32>
    %cst_77 = arith.constant 1.000000e+00 : f32
    %135 = vector.broadcast %cst_77 : f32 to vector<2x8xf32>
    %136 = arith.addf %135, %134 : vector<2x8xf32>
    %137 = arith.divf %135, %136 : vector<2x8xf32>
    %c0_78 = arith.constant 0 : index
    %c0_79 = arith.constant 0 : index
    %138 = vector.load %arg14[%c0_78, %c0_79] : memref<8x128xf32, #tpu.memory_space<vmem>>, vector<8x128xf32>
    %cst_80 = arith.constant dense<0.000000e+00> : vector<2x128xf32>
    %139 = tpu.matmul %137, %138, %cst_80 {dimension_numbers = #tpu.dot_dimension_numbers<[1], [0], [0], [1], [0, 0, 1, 1], [], []>} : vector<2x8xf32>, vector<8x128xf32>, vector<2x128xf32> -> vector<2x128xf32>
    %140 = vector.shape_cast %139 : vector<2x128xf32> to vector<2x1x128xf32>
    %141 = vector.broadcast %140 : vector<2x1x128xf32> to vector<2x4x128xf32>
    %142 = arith.mulf %125, %141 : vector<2x4x128xf32>
    %c0_81 = arith.constant 0 : index
    %c0_82 = arith.constant 0 : index
    %c0_83 = arith.constant 0 : index
    %143 = vector.load %arg16[%c0_81, %c0_82, %c0_83] : memref<2x4x128xf32, #tpu.memory_space<vmem>>, vector<2x4x128xf32>
    tpu.vector_store %arg16[%c0_81, %c0_82, %c0_83], %142 {strides = array<i32>} : memref<2x4x128xf32, #tpu.memory_space<vmem>>, vector<2x4x128xf32>,
    return
  }
}

</mosaic_0001>

<llo_original>
// kernel: tpu_custom_call.1
$region0: #{tpu_custom_call.1}
  #allocation0 [shape = 'u32[]', space=smem, size = 0x4, offset = 0x4, fixed_abs, tag = 'smem constant byte address 0x4 - core index']
  #allocation1 [shape = 'u32[144,128]{1,0:T(1,128)}', space=vmem, size = 0x12000, scoped, tag = 'internal scratch']
  %s0 = inlined_call_operand.vmem [shape: f32[2,4,128], index: 0, kind: input, shape index: {}]
  %s1 = inlined_call_operand.vmem [shape: f32[2,4,128], index: 1, kind: input, shape index: {}]
  %s2 = inlined_call_operand.vmem [shape: bf16[128,128], index: 2, kind: input, shape index: {}]
  %s3 = inlined_call_operand.vmem [shape: f32[1,128], index: 3, kind: input, shape index: {}]
  %s4 = inlined_call_operand.hbm [shape: bf16[128,384], index: 4, kind: input, shape index: {}]
  %s5 = inlined_call_operand.hbm [shape: bf16[128,384], index: 5, kind: input, shape index: {}]
  %s6 = inlined_call_operand.vmem [shape: f32[1,128], index: 6, kind: input, shape index: {}]
  %s7 = inlined_call_operand.vmem [shape: f32[1,8], index: 7, kind: input, shape index: {}]
  %s8 = inlined_call_operand.vmem [shape: f32[1,8], index: 8, kind: input, shape index: {}]
  %s9 = inlined_call_operand.hbm [shape: bf16[128,384], index: 9, kind: input, shape index: {}]
  %s10 = inlined_call_operand.vmem [shape: f32[1,128], index: 10, kind: input, shape index: {}]
  %s11 = inlined_call_operand.vmem [shape: f32[1,8], index: 11, kind: input, shape index: {}]
  %s12 = inlined_call_operand.vmem [shape: f32[1,8], index: 12, kind: input, shape index: {}]
  %s13 = inlined_call_operand.vmem [shape: f32[128,8], index: 13, kind: input, shape index: {}]
  %s14 = inlined_call_operand.vmem [shape: f32[8,128], index: 14, kind: input, shape index: {}]
  %s15 = inlined_call_operand.vmem [shape: f32[8,8], index: 15, kind: input, shape index: {}]
  %s16 = inlined_call_operand.hbm [shape: f32[2,4,128], index: 16, kind: output, shape index: {}]
  %s17 = sld [smem:[#allocation0]]
  $region86: #{tpu_custom_call.1} parent=0
    _
  %s19 = ssub.s32 1, %s17
  %s20 = scalar_select 0, %s19, %s17
  $region1: #{tpu_custom_call.1} parent=0
    #allocation2 [shape = 'u8[98304]{0}', space=vmem, size = 0x18000, scoped, tag = 'input window, operand 4, single buffered']
    #allocation3 [shape = 's32[1]{0}', space=sflag, size = 0x4, scoped, tag = 'scoped memory for tpu_custom_call.1']
    #allocation4 [shape = 's32[1]{0}', space=sflag, size = 0x4, scoped, tag = 'scoped memory for tpu_custom_call.1']
    #allocation5 [shape = 'u8[98304]{0}', space=vmem, size = 0x18000, scoped, tag = 'input window, operand 5, single buffered']
    #allocation6 [shape = 's32[1]{0}', space=sflag, size = 0x4, scoped, tag = 'scoped memory for tpu_custom_call.1']
    #allocation7 [shape = 'u8[98304]{0}', space=vmem, size = 0x18000, scoped, tag = 'input window, operand 9, single buffered']
    #allocation8 [shape = 'u8[4096]{0}', space=vmem, size = 0x1000, scoped, tag = 'output window, operand 0, single buffered']
    %21 = vsyncpa [#allocation3], 0
    %22 = vsyncpa [#allocation6], 0
    %23 = vsyncpa [#allocation4], 0
    // Predicated region
    $region2: #{tpu_custom_call.1} parent=1 // pred_check
      _
    $region3: #{tpu_custom_call.1} parent=1 // pred_check_branch
      %25 = sbr.rel (0) target = $region5
    $region4: #{tpu_custom_call.1} parent=1 // pred_region
      _
    $region5: #{tpu_custom_call.1} parent=1 // pred_fallthru
      _
    // Predicated region
    $region6: #{tpu_custom_call.1} parent=1 // pred_check
      _
    $region7: #{tpu_custom_call.1} parent=1 // pred_check_branch
      %27 = sbr.rel (0) target = $region9
    $region8: #{tpu_custom_call.1} parent=1 // pred_region
      _
    $region9: #{tpu_custom_call.1} parent=1 // pred_fallthru
      _
    // Predicated region
    $region10: #{tpu_custom_call.1} parent=1 // pred_check
      _
    $region11: #{tpu_custom_call.1} parent=1 // pred_check_branch
      %29 = sbr.rel (0) target = $region13
    $region12: #{tpu_custom_call.1} parent=1 // pred_region
      _
    $region13: #{tpu_custom_call.1} parent=1 // pred_fallthru
      _
    // Predicated region
    $region14: #{tpu_custom_call.1} parent=1 // pred_check
      _
    $region15: #{tpu_custom_call.1} parent=1 // pred_check_branch
      %31 = sbr.rel (0) target = $region17
    $region16: #{tpu_custom_call.1} parent=1 // pred_region
      _
    $region17: #{tpu_custom_call.1} parent=1 // pred_fallthru
      _
    // Predicated region
    $region18: #{tpu_custom_call.1} parent=1 // pred_check
      _
    $region19: #{tpu_custom_call.1} parent=1 // pred_check_branch
      %33 = sbr.rel (0) target = $region21
    $region20: #{tpu_custom_call.1} parent=1 // pred_region
      %s35 = ssub.s32 3072, 3072
      %36 = vsyncadd [#allocation3], %s35
      %s37 = sshll.u32 [#allocation2], 4
      %s38 = int_to_ptr.vmem [resolvable:$true] %s37
      %43 = dma.hbm_to_vmem [thread:$0]  %s4, 3072, %s38, [#allocation3], 192, 192, 12
    $region21: #{tpu_custom_call.1} parent=1 // pred_fallthru
      _
    // Predicated region
    $region22: #{tpu_custom_call.1} parent=1 // pred_check
      _
    $region23: #{tpu_custom_call.1} parent=1 // pred_check_branch
      %45 = sbr.rel (0) target = $region25
    $region24: #{tpu_custom_call.1} parent=1 // pred_region
      %s47 = ssub.s32 3072, 3072
      %48 = vsyncadd [#allocation6], %s47
      %s49 = sshll.u32 [#allocation5], 4
      %s50 = int_to_ptr.vmem [resolvable:$true] %s49
      %55 = dma.hbm_to_vmem [thread:$0]  %s5, 3072, %s50, [#allocation6], 192, 192, 12
    $region25: #{tpu_custom_call.1} parent=1 // pred_fallthru
      _
    // Predicated region
    $region26: #{tpu_custom_call.1} parent=1 // pred_check
      _
    $region27: #{tpu_custom_call.1} parent=1 // pred_check_branch
      %57 = sbr.rel (0) target = $region29
    $region28: #{tpu_custom_call.1} parent=1 // pred_region
      _
    $region29: #{tpu_custom_call.1} parent=1 // pred_fallthru
      _
    // Predicated region
    $region30: #{tpu_custom_call.1} parent=1 // pred_check
      _
    $region31: #{tpu_custom_call.1} parent=1 // pred_check_branch
      %59 = sbr.rel (0) target = $region33
    $region32: #{tpu_custom_call.1} parent=1 // pred_region
      _
    $region33: #{tpu_custom_call.1} parent=1 // pred_fallthru
      _
    // Predicated region
    $region34: #{tpu_custom_call.1} parent=1 // pred_check
      _
    $region35: #{tpu_custom_call.1} parent=1 // pred_check_branch
      %61 = sbr.rel (0) target = $region37
    $region36: #{tpu_custom_call.1} parent=1 // pred_region
      _
    $region37: #{tpu_custom_call.1} parent=1 // pred_fallthru
      _
    // Predicated region
    $region38: #{tpu_custom_call.1} parent=1 // pred_check
      _
    $region39: #{tpu_custom_call.1} parent=1 // pred_check_branch
      %63 = sbr.rel (0) target = $region41
    $region40: #{tpu_custom_call.1} parent=1 // pred_region
      %s65 = ssub.s32 3072, 3072
      %66 = vsyncadd [#allocation6], %s65
      %s67 = sshll.u32 [#allocation7], 4
      %s68 = int_to_ptr.vmem [resolvable:$true] %s67
      %73 = dma.hbm_to_vmem [thread:$0]  %s9, 3072, %s68, [#allocation6], 192, 192, 12
    $region41: #{tpu_custom_call.1} parent=1 // pred_fallthru
      _
    // Predicated region
    $region42: #{tpu_custom_call.1} parent=1 // pred_check
      _
    $region43: #{tpu_custom_call.1} parent=1 // pred_check_branch
      %75 = sbr.rel (0) target = $region45
    $region44: #{tpu_custom_call.1} parent=1 // pred_region
      _
    $region45: #{tpu_custom_call.1} parent=1 // pred_fallthru
      _
    // Predicated region
    $region46: #{tpu_custom_call.1} parent=1 // pred_check
      _
    $region47: #{tpu_custom_call.1} parent=1 // pred_check_branch
      %77 = sbr.rel (0) target = $region49
    $region48: #{tpu_custom_call.1} parent=1 // pred_region
      _
    $region49: #{tpu_custom_call.1} parent=1 // pred_fallthru
      _
    // Predicated region
    $region50: #{tpu_custom_call.1} parent=1 // pred_check
      _
    $region51: #{tpu_custom_call.1} parent=1 // pred_check_branch
      %79 = sbr.rel (0) target = $region53
    $region52: #{tpu_custom_call.1} parent=1 // pred_region
      _
    $region53: #{tpu_custom_call.1} parent=1 // pred_fallthru
      _
    // Predicated region
    $region54: #{tpu_custom_call.1} parent=1 // pred_check
      _
    $region55: #{tpu_custom_call.1} parent=1 // pred_check_branch
      %81 = sbr.rel (0) target = $region57
    $region56: #{tpu_custom_call.1} parent=1 // pred_region
      _
    $region57: #{tpu_custom_call.1} parent=1 // pred_fallthru
      _
    // Predicated region
    $region58: #{tpu_custom_call.1} parent=1 // pred_check
      _
    $region59: #{tpu_custom_call.1} parent=1 // pred_check_branch
      %83 = sbr.rel (0) target = $region61
    $region60: #{tpu_custom_call.1} parent=1 // pred_region
      _
    $region61: #{tpu_custom_call.1} parent=1 // pred_fallthru
      _
    // Predicated region
    $region62: #{tpu_custom_call.1} parent=1 // pred_check
      _
    $region63: #{tpu_custom_call.1} parent=1 // pred_check_branch
      %85 = sbr.rel (0) target = $region65
    $region64: #{tpu_custom_call.1} parent=1 // pred_region
      _
    $region65: #{tpu_custom_call.1} parent=1 // pred_fallthru
      _
    // Predicated region
    $region66: #{tpu_custom_call.1} parent=1 // pred_check
      _
    $region67: #{tpu_custom_call.1} parent=1 // pred_check_branch
      %87 = sbr.rel (0) target = $region69
    $region68: #{tpu_custom_call.1} parent=1 // pred_region
      %88 = dma.done [#allocation3], 3072
    $region69: #{tpu_custom_call.1} parent=1 // pred_fallthru
      _
    // Predicated region
    $region70: #{tpu_custom_call.1} parent=1 // pred_check
      _
    $region71: #{tpu_custom_call.1} parent=1 // pred_check_branch
      %90 = sbr.rel (0) target = $region73
    $region72: #{tpu_custom_call.1} parent=1 // pred_region
      %91 = dma.done [#allocation6], 3072
    $region73: #{tpu_custom_call.1} parent=1 // pred_fallthru
      _
    // Predicated region
    $region74: #{tpu_custom_call.1} parent=1 // pred_check
      _
    $region75: #{tpu_custom_call.1} parent=1 // pred_check_branch
      %93 = sbr.rel (0) target = $region77
    $region76: #{tpu_custom_call.1} parent=1 // pred_region
      %94 = dma.done [#allocation6], 3072
    $region77: #{tpu_custom_call.1} parent=1 // pred_fallthru
      _
    %v96 = vld [vmem:[%s0] sm:$0xf]
    %v97 = vld [vmem:[%s0 + $0x4] sm:$0xf]
    %v100 = vcombine.low %v96, %v97
    %v102 = vpack.c.bf16 %v100, %v100
    %v103 = vld [vmem:[%s2] sm:$0xf]
    %v104 = vld [vmem:[%s2 + $0x4] sm:$0xf]
    %v105 = vld [vmem:[%s2 + $0x8] sm:$0xf]
    %v106 = vld [vmem:[%s2 + $0xc] sm:$0xf]
    %v107 = vld [vmem:[%s2 + $0x10] sm:$0xf]
    %v108 = vld [vmem:[%s2 + $0x14] sm:$0xf]
    %v109 = vld [vmem:[%s2 + $0x18] sm:$0xf]
    %v110 = vld [vmem:[%s2 + $0x1c] sm:$0xf]
    %v111 = vld [vmem:[%s2 + $0x20] sm:$0xf]
    %v112 = vld [vmem:[%s2 + $0x24] sm:$0xf]
    %v113 = vld [vmem:[%s2 + $0x28] sm:$0xf]
    %v114 = vld [vmem:[%s2 + $0x2c] sm:$0xf]
    %v115 = vld [vmem:[%s2 + $0x30] sm:$0xf]
    %v116 = vld [vmem:[%s2 + $0x34] sm:$0xf]
    %v117 = vld [vmem:[%s2 + $0x38] sm:$0xf]
    %v118 = vld [vmem:[%s2 + $0x3c] sm:$0xf]
    %v135 = vunpack.c.l.b16 %v103
    %v136 = vunpack.c.l.b16 %v104
    %v137 = vunpack.c.l.b16 %v105
    %v138 = vunpack.c.l.b16 %v106
    %v139 = vunpack.c.l.b16 %v107
    %v140 = vunpack.c.l.b16 %v108
    %v141 = vunpack.c.l.b16 %v109
    %v142 = vunpack.c.l.b16 %v110
    %v143 = vunpack.c.l.b16 %v111
    %v144 = vunpack.c.l.b16 %v112
    %v145 = vunpack.c.l.b16 %v113
    %v146 = vunpack.c.l.b16 %v114
    %v147 = vunpack.c.l.b16 %v115
    %v148 = vunpack.c.l.b16 %v116
    %v149 = vunpack.c.l.b16 %v117
    %v150 = vunpack.c.l.b16 %v118
    %v151 = vpack.c.b16 %v136, %v135
    %v152 = vpack.c.b16 %v138, %v137
    %v153 = vpack.c.b16 %v140, %v139
    %v154 = vpack.c.b16 %v142, %v141
    %v155 = vpack.c.b16 %v144, %v143
    %v156 = vpack.c.b16 %v146, %v145
    %v157 = vpack.c.b16 %v148, %v147
    %v158 = vpack.c.b16 %v150, %v149
    %167 = vmatprep.subr.bf16.mxu0 0
    %168 = vmatpush1.bf16.msra.mxu0 %v158
    %169 = vmatprep.subr.bf16.mxu0 0
    %170 = vmatpush1.bf16.msra.mxu0 %v157
    %171 = vmatprep.subr.bf16.mxu0 0
    %172 = vmatpush1.bf16.msra.mxu0 %v156
    %173 = vmatprep.subr.bf16.mxu0 0
    %174 = vmatpush1.bf16.msra.mxu0 %v155
    %175 = vmatprep.subr.bf16.mxu0 0
    %176 = vmatpush1.bf16.msra.mxu0 %v154
    %177 = vmatprep.subr.bf16.mxu0 0
    %178 = vmatpush1.bf16.msra.mxu0 %v153
    %179 = vmatprep.subr.bf16.mxu0 0
    %180 = vmatpush1.bf16.msra.mxu0 %v152
    %181 = vmatprep.subr.bf16.mxu0 0
    %182 = vmatpush1.bf16.msra.mxu0 %v151
    %183 = vmatprep.subr.bf16.mxu0 0
    %184 = vmatpush2.bf16.msra.mxu0 0
    %185 = vmatprep.subr.bf16.mxu0 0
    %186 = vmatpush2.bf16.msra.mxu0 0
    %187 = vmatprep.subr.bf16.mxu0 0
    %188 = vmatpush2.bf16.msra.mxu0 0
    %189 = vmatprep.subr.bf16.mxu0 0
    %190 = vmatpush2.bf16.msra.mxu0 0
    %191 = vmatprep.subr.bf16.mxu0 0
    %192 = vmatpush2.bf16.msra.mxu0 0
    %193 = vmatprep.subr.bf16.mxu0 0
    %194 = vmatpush2.bf16.msra.mxu0 0
    %195 = vmatprep.subr.bf16.mxu0 0
    %196 = vmatpush2.bf16.msra.mxu0 0
    %197 = vmatprep.subr.bf16.mxu0 0
    %198 = vmatpush2.bf16.msra.mxu0 0
    %199 = vmatprep.mubr.bf16.mxu0 0
    %200 = vmatmul.mubr.bf16.gmra.mxu0 %v102
    %v201 = vpop.f32.mrf.mxu0
    %v202 = vadd.f32 0.0, %v201
    %v203 = vpop.f32.mrf.mxu0
    %v204 = vpop.f32.mrf.mxu0
    %v205 = vpop.f32.mrf.mxu0
    %206 = vdwg.mxu0
    %v208 = vcombine.high %v202, %v202
    %v210 = vld [vmem:[%s3] sm:$0x1]
    %v212 = vlaneseq
    %v213 = vshrl.u32 %v212, 7
    %v214 = vsub.s32 0, %v213
    %v215 = vrot.slane %v210, %v214
    %v217 = vadd.f32 %v202, %v215
    %v218 = vadd.f32 %v208, %v215
    %v221 = vcombine.low %v217, %v218
    %v223 = vpack.c.bf16 %v221, %v221
    %v224 = vld [vmem:[#allocation2] sm:$0xff]
    %v225 = vld [vmem:[#allocation2 + $0x8] sm:$0xf]
    %v226 = vld [vmem:[#allocation2 + $0xc] sm:$0xff]
    %v227 = vld [vmem:[#allocation2 + $0x14] sm:$0xf]
    %v228 = vld [vmem:[#allocation2 + $0x18] sm:$0xff]
    %v229 = vld [vmem:[#allocation2 + $0x20] sm:$0xf]
    %v230 = vld [vmem:[#allocation2 + $0x24] sm:$0xff]
    %v231 = vld [vmem:[#allocation2 + $0x2c] sm:$0xf]
    %v232 = vld [vmem:[#allocation2 + $0x30] sm:$0xff]
    %v233 = vld [vmem:[#allocation2 + $0x38] sm:$0xf]
    %v234 = vld [vmem:[#allocation2 + $0x3c] sm:$0xff]
    %v235 = vld [vmem:[#allocation2 + $0x44] sm:$0xf]
    %v236 = vld [vmem:[#allocation2 + $0x48] sm:$0xff]
    %v237 = vld [vmem:[#allocation2 + $0x50] sm:$0xf]
    %v238 = vld [vmem:[#allocation2 + $0x54] sm:$0xff]
    %v239 = vld [vmem:[#allocation2 + $0x5c] sm:$0xf]
    %v240 = vld [vmem:[#allocation2 + $0x60] sm:$0xff]
    %v241 = vld [vmem:[#allocation2 + $0x68] sm:$0xf]
    %v242 = vld [vmem:[#allocation2 + $0x6c] sm:$0xff]
    %v243 = vld [vmem:[#allocation2 + $0x74] sm:$0xf]
    %v244 = vld [vmem:[#allocation2 + $0x78] sm:$0xff]
    %v245 = vld [vmem:[#allocation2 + $0x80] sm:$0xf]
    %v246 = vld [vmem:[#allocation2 + $0x84] sm:$0xff]
    %v247 = vld [vmem:[#allocation2 + $0x8c] sm:$0xf]
    %v248 = vld [vmem:[#allocation2 + $0x90] sm:$0xff]
    %v249 = vld [vmem:[#allocation2 + $0x98] sm:$0xf]
    %v250 = vld [vmem:[#allocation2 + $0x9c] sm:$0xff]
    %v251 = vld [vmem:[#allocation2 + $0xa4] sm:$0xf]
    %v252 = vld [vmem:[#allocation2 + $0xa8] sm:$0xff]
    %v253 = vld [vmem:[#allocation2 + $0xb0] sm:$0xf]
    %v254 = vld [vmem:[#allocation2 + $0xb4] sm:$0xff]
    %v255 = vld [vmem:[#allocation2 + $0xbc] sm:$0xf]
    %v288 = vunpack.c.l.b16 %v224
    %v289 = vunpack.c.h.b16 %v224
    %v290 = vunpack.c.l.b16 %v225
    %v291 = vunpack.c.l.b16 %v226
    %v292 = vunpack.c.h.b16 %v226
    %v293 = vunpack.c.l.b16 %v227
    %v294 = vunpack.c.l.b16 %v228
    %v295 = vunpack.c.h.b16 %v228
    %v296 = vunpack.c.l.b16 %v229
    %v297 = vunpack.c.l.b16 %v230
    %v298 = vunpack.c.h.b16 %v230
    %v299 = vunpack.c.l.b16 %v231
    %v300 = vunpack.c.l.b16 %v232
    %v301 = vunpack.c.h.b16 %v232
    %v302 = vunpack.c.l.b16 %v233
    %v303 = vunpack.c.l.b16 %v234
    %v304 = vunpack.c.h.b16 %v234
    %v305 = vunpack.c.l.b16 %v235
    %v306 = vunpack.c.l.b16 %v236
    %v307 = vunpack.c.h.b16 %v236
    %v308 = vunpack.c.l.b16 %v237
    %v309 = vunpack.c.l.b16 %v238
    %v310 = vunpack.c.h.b16 %v238
    %v311 = vunpack.c.l.b16 %v239
    %v312 = vunpack.c.l.b16 %v240
    %v313 = vunpack.c.h.b16 %v240
    %v314 = vunpack.c.l.b16 %v241
    %v315 = vunpack.c.l.b16 %v242
    %v316 = vunpack.c.h.b16 %v242
    %v317 = vunpack.c.l.b16 %v243
    %v318 = vunpack.c.l.b16 %v244
    %v319 = vunpack.c.h.b16 %v244
    %v320 = vunpack.c.l.b16 %v245
    %v321 = vunpack.c.l.b16 %v246
    %v322 = vunpack.c.h.b16 %v246
    %v323 = vunpack.c.l.b16 %v247
    %v324 = vunpack.c.l.b16 %v248
    %v325 = vunpack.c.h.b16 %v248
    %v326 = vunpack.c.l.b16 %v249
    %v327 = vunpack.c.l.b16 %v250
    %v328 = vunpack.c.h.b16 %v250
    %v329 = vunpack.c.l.b16 %v251
    %v330 = vunpack.c.l.b16 %v252
    %v331 = vunpack.c.h.b16 %v252
    %v332 = vunpack.c.l.b16 %v253
    %v333 = vunpack.c.l.b16 %v254
    %v334 = vunpack.c.h.b16 %v254
    %v335 = vunpack.c.l.b16 %v255
    %v336 = vpack.c.b16 %v291, %v288
    %v337 = vpack.c.b16 %v292, %v289
    %v338 = vpack.c.b16 %v293, %v290
    %v339 = vpack.c.b16 %v297, %v294
    %v340 = vpack.c.b16 %v298, %v295
    %v341 = vpack.c.b16 %v299, %v296
    %v342 = vpack.c.b16 %v303, %v300
    %v343 = vpack.c.b16 %v304, %v301
    %v344 = vpack.c.b16 %v305, %v302
    %v345 = vpack.c.b16 %v309, %v306
    %v346 = vpack.c.b16 %v310, %v307
    %v347 = vpack.c.b16 %v311, %v308
    %v348 = vpack.c.b16 %v315, %v312
    %v349 = vpack.c.b16 %v316, %v313
    %v350 = vpack.c.b16 %v317, %v314
    %v351 = vpack.c.b16 %v321, %v318
    %v352 = vpack.c.b16 %v322, %v319
    %v353 = vpack.c.b16 %v323, %v320
    %v354 = vpack.c.b16 %v327, %v324
    %v355 = vpack.c.b16 %v328, %v325
    %v356 = vpack.c.b16 %v329, %v326
    %v357 = vpack.c.b16 %v333, %v330
    %v358 = vpack.c.b16 %v334, %v331
    %v359 = vpack.c.b16 %v335, %v332
    %384 = vmatprep.subr.bf16.mxu0 %v358
    %385 = vmatpush1.bf16.msra.mxu0 %v357
    %386 = vmatprep.subr.bf16.mxu0 %v355
    %387 = vmatpush1.bf16.msra.mxu0 %v354
    %388 = vmatprep.subr.bf16.mxu0 %v352
    %389 = vmatpush1.bf16.msra.mxu0 %v351
    %390 = vmatprep.subr.bf16.mxu0 %v349
    %391 = vmatpush1.bf16.msra.mxu0 %v348
    %392 = vmatprep.subr.bf16.mxu0 %v346
    %393 = vmatpush1.bf16.msra.mxu0 %v345
    %394 = vmatprep.subr.bf16.mxu0 %v343
    %395 = vmatpush1.bf16.msra.mxu0 %v342
    %396 = vmatprep.subr.bf16.mxu0 %v340
    %397 = vmatpush1.bf16.msra.mxu0 %v339
    %398 = vmatprep.subr.bf16.mxu0 %v337
    %399 = vmatpush1.bf16.msra.mxu0 %v336
    %400 = vmatprep.subr.bf16.mxu0 0
    %401 = vmatpush2.bf16.msra.mxu0 0
    %402 = vmatprep.subr.bf16.mxu0 0
    %403 = vmatpush2.bf16.msra.mxu0 0
    %404 = vmatprep.subr.bf16.mxu0 0
    %405 = vmatpush2.bf16.msra.mxu0 0
    %406 = vmatprep.subr.bf16.mxu0 0
    %407 = vmatpush2.bf16.msra.mxu0 0
    %408 = vmatprep.subr.bf16.mxu0 0
    %409 = vmatpush2.bf16.msra.mxu0 0
    %410 = vmatprep.subr.bf16.mxu0 0
    %411 = vmatpush2.bf16.msra.mxu0 0
    %412 = vmatprep.subr.bf16.mxu0 0
    %413 = vmatpush2.bf16.msra.mxu0 0
    %414 = vmatprep.subr.bf16.mxu0 0
    %415 = vmatpush2.bf16.msra.mxu0 0
    %416 = vmatprep.mubr.bf16.mxu0 0
    %417 = vmatmul.mubr.bf16.gmra.mxu0 %v223
    %v418 = vpop.f32.mrf.mxu0
    %v419 = vadd.f32 0.0, %v418
    %v420 = vpop.f32.mrf.mxu0
    %v421 = vadd.f32 0.0, %v420
    %v422 = vpop.f32.mrf.mxu0
    %v423 = vpop.f32.mrf.mxu0
    %424 = vdwg.mxu0
    %425 = vmatprep.subr.bf16.mxu0 0
    %426 = vmatpush1.bf16.msra.mxu0 %v359
    %427 = vmatprep.subr.bf16.mxu0 0
    %428 = vmatpush1.bf16.msra.mxu0 %v356
    %429 = vmatprep.subr.bf16.mxu0 0
    %430 = vmatpush1.bf16.msra.mxu0 %v353
    %431 = vmatprep.subr.bf16.mxu0 0
    %432 = vmatpush1.bf16.msra.mxu0 %v350
    %433 = vmatprep.subr.bf16.mxu0 0
    %434 = vmatpush1.bf16.msra.mxu0 %v347
    %435 = vmatprep.subr.bf16.mxu0 0
    %436 = vmatpush1.bf16.msra.mxu0 %v344
    %437 = vmatprep.subr.bf16.mxu0 0
    %438 = vmatpush1.bf16.msra.mxu0 %v341
    %439 = vmatprep.subr.bf16.mxu0 0
    %440 = vmatpush1.bf16.msra.mxu0 %v338
    %441 = vmatprep.subr.bf16.mxu0 0
    %442 = vmatpush2.bf16.msra.mxu0 0
    %443 = vmatprep.subr.bf16.mxu0 0
    %444 = vmatpush2.bf16.msra.mxu0 0
    %445 = vmatprep.subr.bf16.mxu0 0
    %446 = vmatpush2.bf16.msra.mxu0 0
    %447 = vmatprep.subr.bf16.mxu0 0
    %448 = vmatpush2.bf16.msra.mxu0 0
    %449 = vmatprep.subr.bf16.mxu0 0
    %450 = vmatpush2.bf16.msra.mxu0 0
    %451 = vmatprep.subr.bf16.mxu0 0
    %452 = vmatpush2.bf16.msra.mxu0 0
    %453 = vmatprep.subr.bf16.mxu0 0
    %454 = vmatpush2.bf16.msra.mxu0 0
    %455 = vmatprep.subr.bf16.mxu0 0
    %456 = vmatpush2.bf16.msra.mxu0 0
    %457 = vmatprep.mubr.bf16.mxu0 0
    %458 = vmatmul.mubr.bf16.gmra.mxu0 %v223
    %v459 = vpop.f32.mrf.mxu0
    %v460 = vadd.f32 0.0, %v459
    %v461 = vpop.f32.mrf.mxu0
    %v462 = vpop.f32.mrf.mxu0
    %v463 = vpop.f32.mrf.mxu0
    %464 = vdwg.mxu0
    %v468 = vcombine.low %v419, %v421
    %v469 = vcombine.high %v419, %v421
    %v470 = vcombine.high %v460, %v460
    %v474 = vld [vmem:[%s1] sm:$0xf]
    %v475 = vld [vmem:[%s1 + $0x4] sm:$0xf]
    %v478 = vcombine.low %v474, %v475
    %v480 = vpack.c.bf16 %v478, %v478
    %v481 = vld [vmem:[#allocation5] sm:$0xff]
    %v482 = vld [vmem:[#allocation5 + $0x8] sm:$0xf]
    %v483 = vld [vmem:[#allocation5 + $0xc] sm:$0xff]
    %v484 = vld [vmem:[#allocation5 + $0x14] sm:$0xf]
    %v485 = vld [vmem:[#allocation5 + $0x18] sm:$0xff]
    %v486 = vld [vmem:[#allocation5 + $0x20] sm:$0xf]
    %v487 = vld [vmem:[#allocation5 + $0x24] sm:$0xff]
    %v488 = vld [vmem:[#allocation5 + $0x2c] sm:$0xf]
    %v489 = vld [vmem:[#allocation5 + $0x30] sm:$0xff]
    %v490 = vld [vmem:[#allocation5 + $0x38] sm:$0xf]
    %v491 = vld [vmem:[#allocation5 + $0x3c] sm:$0xff]
    %v492 = vld [vmem:[#allocation5 + $0x44] sm:$0xf]
    %v493 = vld [vmem:[#allocation5 + $0x48] sm:$0xff]
    %v494 = vld [vmem:[#allocation5 + $0x50] sm:$0xf]
    %v495 = vld [vmem:[#allocation5 + $0x54] sm:$0xff]
    %v496 = vld [vmem:[#allocation5 + $0x5c] sm:$0xf]
    %v497 = vld [vmem:[#allocation5 + $0x60] sm:$0xff]
    %v498 = vld [vmem:[#allocation5 + $0x68] sm:$0xf]
    %v499 = vld [vmem:[#allocation5 + $0x6c] sm:$0xff]
    %v500 = vld [vmem:[#allocation5 + $0x74] sm:$0xf]
    %v501 = vld [vmem:[#allocation5 + $0x78] sm:$0xff]
    %v502 = vld [vmem:[#allocation5 + $0x80] sm:$0xf]
    %v503 = vld [vmem:[#allocation5 + $0x84] sm:$0xff]
    %v504 = vld [vmem:[#allocation5 + $0x8c] sm:$0xf]
    %v505 = vld [vmem:[#allocation5 + $0x90] sm:$0xff]
    %v506 = vld [vmem:[#allocation5 + $0x98] sm:$0xf]
    %v507 = vld [vmem:[#allocation5 + $0x9c] sm:$0xff]
    %v508 = vld [vmem:[#allocation5 + $0xa4] sm:$0xf]
    %v509 = vld [vmem:[#allocation5 + $0xa8] sm:$0xff]
    %v510 = vld [vmem:[#allocation5 + $0xb0] sm:$0xf]
    %v511 = vld [vmem:[#allocation5 + $0xb4] sm:$0xff]
    %v512 = vld [vmem:[#allocation5 + $0xbc] sm:$0xf]
    %v545 = vunpack.c.l.b16 %v481
    %v546 = vunpack.c.h.b16 %v481
    %v547 = vunpack.c.l.b16 %v482
    %v548 = vunpack.c.l.b16 %v483
    %v549 = vunpack.c.h.b16 %v483
    %v550 = vunpack.c.l.b16 %v484
    %v551 = vunpack.c.l.b16 %v485
    %v552 = vunpack.c.h.b16 %v485
    %v553 = vunpack.c.l.b16 %v486
    %v554 = vunpack.c.l.b16 %v487
    %v555 = vunpack.c.h.b16 %v487
    %v556 = vunpack.c.l.b16 %v488
    %v557 = vunpack.c.l.b16 %v489
    %v558 = vunpack.c.h.b16 %v489
    %v559 = vunpack.c.l.b16 %v490
    %v560 = vunpack.c.l.b16 %v491
    %v561 = vunpack.c.h.b16 %v491
    %v562 = vunpack.c.l.b16 %v492
    %v563 = vunpack.c.l.b16 %v493
    %v564 = vunpack.c.h.b16 %v493
    %v565 = vunpack.c.l.b16 %v494
    %v566 = vunpack.c.l.b16 %v495
    %v567 = vunpack.c.h.b16 %v495
    %v568 = vunpack.c.l.b16 %v496
    %v569 = vunpack.c.l.b16 %v497
    %v570 = vunpack.c.h.b16 %v497
    %v571 = vunpack.c.l.b16 %v498
    %v572 = vunpack.c.l.b16 %v499
    %v573 = vunpack.c.h.b16 %v499
    %v574 = vunpack.c.l.b16 %v500
    %v575 = vunpack.c.l.b16 %v501
    %v576 = vunpack.c.h.b16 %v501
    %v577 = vunpack.c.l.b16 %v502
    %v578 = vunpack.c.l.b16 %v503
    %v579 = vunpack.c.h.b16 %v503
    %v580 = vunpack.c.l.b16 %v504
    %v581 = vunpack.c.l.b16 %v505
    %v582 = vunpack.c.h.b16 %v505
    %v583 = vunpack.c.l.b16 %v506
    %v584 = vunpack.c.l.b16 %v507
    %v585 = vunpack.c.h.b16 %v507
    %v586 = vunpack.c.l.b16 %v508
    %v587 = vunpack.c.l.b16 %v509
    %v588 = vunpack.c.h.b16 %v509
    %v589 = vunpack.c.l.b16 %v510
    %v590 = vunpack.c.l.b16 %v511
    %v591 = vunpack.c.h.b16 %v511
    %v592 = vunpack.c.l.b16 %v512
    %v593 = vpack.c.b16 %v548, %v545
    %v594 = vpack.c.b16 %v549, %v546
    %v595 = vpack.c.b16 %v550, %v547
    %v596 = vpack.c.b16 %v554, %v551
    %v597 = vpack.c.b16 %v555, %v552
    %v598 = vpack.c.b16 %v556, %v553
    %v599 = vpack.c.b16 %v560, %v557
    %v600 = vpack.c.b16 %v561, %v558
    %v601 = vpack.c.b16 %v562, %v559
    %v602 = vpack.c.b16 %v566, %v563
    %v603 = vpack.c.b16 %v567, %v564
    %v604 = vpack.c.b16 %v568, %v565
    %v605 = vpack.c.b16 %v572, %v569
    %v606 = vpack.c.b16 %v573, %v570
    %v607 = vpack.c.b16 %v574, %v571
    %v608 = vpack.c.b16 %v578, %v575
    %v609 = vpack.c.b16 %v579, %v576
    %v610 = vpack.c.b16 %v580, %v577
    %v611 = vpack.c.b16 %v584, %v581
    %v612 = vpack.c.b16 %v585, %v582
    %v613 = vpack.c.b16 %v586, %v583
    %v614 = vpack.c.b16 %v590, %v587
    %v615 = vpack.c.b16 %v591, %v588
    %v616 = vpack.c.b16 %v592, %v589
    %641 = vmatprep.subr.bf16.mxu0 %v615
    %642 = vmatpush1.bf16.msra.mxu0 %v614
    %643 = vmatprep.subr.bf16.mxu0 %v612
    %644 = vmatpush1.bf16.msra.mxu0 %v611
    %645 = vmatprep.subr.bf16.mxu0 %v609
    %646 = vmatpush1.bf16.msra.mxu0 %v608
    %647 = vmatprep.subr.bf16.mxu0 %v606
    %648 = vmatpush1.bf16.msra.mxu0 %v605
    %649 = vmatprep.subr.bf16.mxu0 %v603
    %650 = vmatpush1.bf16.msra.mxu0 %v602
    %651 = vmatprep.subr.bf16.mxu0 %v600
    %652 = vmatpush1.bf16.msra.mxu0 %v599
    %653 = vmatprep.subr.bf16.mxu0 %v597
    %654 = vmatpush1.bf16.msra.mxu0 %v596
    %655 = vmatprep.subr.bf16.mxu0 %v594
    %656 = vmatpush1.bf16.msra.mxu0 %v593
    %657 = vmatprep.subr.bf16.mxu0 0
    %658 = vmatpush2.bf16.msra.mxu0 0
    %659 = vmatprep.subr.bf16.mxu0 0
    %660 = vmatpush2.bf16.msra.mxu0 0
    %661 = vmatprep.subr.bf16.mxu0 0
    %662 = vmatpush2.bf16.msra.mxu0 0
    %663 = vmatprep.subr.bf16.mxu0 0
    %664 = vmatpush2.bf16.msra.mxu0 0
    %665 = vmatprep.subr.bf16.mxu0 0
    %666 = vmatpush2.bf16.msra.mxu0 0
    %667 = vmatprep.subr.bf16.mxu0 0
    %668 = vmatpush2.bf16.msra.mxu0 0
    %669 = vmatprep.subr.bf16.mxu0 0
    %670 = vmatpush2.bf16.msra.mxu0 0
    %671 = vmatprep.subr.bf16.mxu0 0
    %672 = vmatpush2.bf16.msra.mxu0 0
    %673 = vmatprep.mubr.bf16.mxu0 0
    %674 = vmatmul.mubr.bf16.gmra.mxu0 %v480
    %v675 = vpop.f32.mrf.mxu0
    %v676 = vadd.f32 0.0, %v675
    %v677 = vpop.f32.mrf.mxu0
    %v678 = vadd.f32 0.0, %v677
    %v679 = vpop.f32.mrf.mxu0
    %v680 = vpop.f32.mrf.mxu0
    %681 = vdwg.mxu0
    %682 = vmatprep.subr.bf16.mxu0 0
    %683 = vmatpush1.bf16.msra.mxu0 %v616
    %684 = vmatprep.subr.bf16.mxu0 0
    %685 = vmatpush1.bf16.msra.mxu0 %v613
    %686 = vmatprep.subr.bf16.mxu0 0
    %687 = vmatpush1.bf16.msra.mxu0 %v610
    %688 = vmatprep.subr.bf16.mxu0 0
    %689 = vmatpush1.bf16.msra.mxu0 %v607
    %690 = vmatprep.subr.bf16.mxu0 0
    %691 = vmatpush1.bf16.msra.mxu0 %v604
    %692 = vmatprep.subr.bf16.mxu0 0
    %693 = vmatpush1.bf16.msra.mxu0 %v601
    %694 = vmatprep.subr.bf16.mxu0 0
    %695 = vmatpush1.bf16.msra.mxu0 %v598
    %696 = vmatprep.subr.bf16.mxu0 0
    %697 = vmatpush1.bf16.msra.mxu0 %v595
    %698 = vmatprep.subr.bf16.mxu0 0
    %699 = vmatpush2.bf16.msra.mxu0 0
    %700 = vmatprep.subr.bf16.mxu0 0
    %701 = vmatpush2.bf16.msra.mxu0 0
    %702 = vmatprep.subr.bf16.mxu0 0
    %703 = vmatpush2.bf16.msra.mxu0 0
    %704 = vmatprep.subr.bf16.mxu0 0
    %705 = vmatpush2.bf16.msra.mxu0 0
    %706 = vmatprep.subr.bf16.mxu0 0
    %707 = vmatpush2.bf16.msra.mxu0 0
    %708 = vmatprep.subr.bf16.mxu0 0
    %709 = vmatpush2.bf16.msra.mxu0 0
    %710 = vmatprep.subr.bf16.mxu0 0
    %711 = vmatpush2.bf16.msra.mxu0 0
    %712 = vmatprep.subr.bf16.mxu0 0
    %713 = vmatpush2.bf16.msra.mxu0 0
    %714 = vmatprep.mubr.bf16.mxu0 0
    %715 = vmatmul.mubr.bf16.gmra.mxu0 %v480
    %v716 = vpop.f32.mrf.mxu0
    %v717 = vadd.f32 0.0, %v716
    %v718 = vpop.f32.mrf.mxu0
    %v719 = vpop.f32.mrf.mxu0
    %v720 = vpop.f32.mrf.mxu0
    %721 = vdwg.mxu0
    %v725 = vcombine.low %v676, %v678
    %v726 = vcombine.high %v676, %v678
    %v727 = vcombine.high %v717, %v717
    %v731 = vadd.f32 %v468, %v725
    %v732 = vadd.f32 %v460, %v717
    %v733 = vadd.f32 %v469, %v726
    %v734 = vadd.f32 %v470, %v727
    %v735 = vld [vmem:[%s6] sm:$0x1]
    %v738 = vrot.slane %v731, 7
    %v739 = vrot.slane %v733, 7
    %vm742 = vcmask 1040384
    %v743 = vsel %vm742, 0.0, %v738
    %v744 = vsel %vm742, 0.0, %v739
    %v745 = vrot.slane %v731, 4
    %v746 = vrot.slane %v733, 4
    %v749 = vadd.f32 %v745, %v743
    %v750 = vadd.f32 %v746, %v744
    %v753 = vrot.slane %v732, 1
    %v754 = vrot.slane %v734, 1
    %vm757 = vcmask 1042432
    %v758 = vsel %vm757, %v753, 0.0
    %v759 = vsel %vm757, %v754, 0.0
    %v760 = vadd.f32 %v749, %v758
    %v761 = vadd.f32 %v750, %v759
    %v763 = vlaneseq
    %v764 = vshrl.u32 %v763, 7
    %v765 = vsub.s32 0, %v764
    %v766 = vrot.slane %v735, %v765
    %v768 = vadd.f32 %v760, %v766
    %v769 = vadd.f32 %v761, %v766
    %v772 = vcombine.low %v768, %v769
    %v774 = vrot.slane %v772, 4
    %v775 = vadd.f32 %v772, %v774
    %v776 = vrot.slane %v775, 2
    %v777 = vadd.f32 %v775, %v776
    %v778 = vrot.slane %v777, 1
    %v779 = vadd.f32 %v777, %v778
    %v780 = vmul.f32 %v768, %v768
    %v781 = vmul.f32 %v769, %v769
    %v784 = vcombine.low %v780, %v781
    %v786 = vrot.slane %v784, 4
    %v787 = vadd.f32 %v784, %v786
    %v788 = vrot.slane %v787, 2
    %v789 = vadd.f32 %v787, %v788
    %v790 = vrot.slane %v789, 1
    %v791 = vadd.f32 %v789, %v790
    %v792 = vld [vmem:[%s13] sm:$0xff]
    %v793 = vld [vmem:[%s13 + $0x8] sm:$0xff]
    %v794 = vld [vmem:[%s13 + $0x10] sm:$0xff]
    %v795 = vld [vmem:[%s13 + $0x18] sm:$0xff]
    %v796 = vld [vmem:[%s13 + $0x20] sm:$0xff]
    %v797 = vld [vmem:[%s13 + $0x28] sm:$0xff]
    %v798 = vld [vmem:[%s13 + $0x30] sm:$0xff]
    %v799 = vld [vmem:[%s13 + $0x38] sm:$0xff]
    %v800 = vld [vmem:[%s13 + $0x40] sm:$0xff]
    %v801 = vld [vmem:[%s13 + $0x48] sm:$0xff]
    %v802 = vld [vmem:[%s13 + $0x50] sm:$0xff]
    %v803 = vld [vmem:[%s13 + $0x58] sm:$0xff]
    %v804 = vld [vmem:[%s13 + $0x60] sm:$0xff]
    %v805 = vld [vmem:[%s13 + $0x68] sm:$0xff]
    %v806 = vld [vmem:[%s13 + $0x70] sm:$0xff]
    %v807 = vld [vmem:[%s13 + $0x78] sm:$0xff]
    %808 = vmatprep.subr.mxu0 0.0
    %809 = vmatpush1.msra.mxu0 %v807
    %810 = vmatprep.subr.mxu0 0.0
    %811 = vmatpush1.msra.mxu0 %v806
    %812 = vmatprep.subr.mxu0 0.0
    %813 = vmatpush1.msra.mxu0 %v805
    %814 = vmatprep.subr.mxu0 0.0
    %815 = vmatpush1.msra.mxu0 %v804
    %816 = vmatprep.subr.mxu0 0.0
    %817 = vmatpush1.msra.mxu0 %v803
    %818 = vmatprep.subr.mxu0 0.0
    %819 = vmatpush1.msra.mxu0 %v802
    %820 = vmatprep.subr.mxu0 0.0
    %821 = vmatpush1.msra.mxu0 %v801
    %822 = vmatprep.subr.mxu0 0.0
    %823 = vmatpush1.msra.mxu0 %v800
    %824 = vmatprep.subr.mxu0 0.0
    %825 = vmatpush1.msra.mxu0 %v799
    %826 = vmatprep.subr.mxu0 0.0
    %827 = vmatpush1.msra.mxu0 %v798
    %828 = vmatprep.subr.mxu0 0.0
    %829 = vmatpush1.msra.mxu0 %v797
    %830 = vmatprep.subr.mxu0 0.0
    %831 = vmatpush1.msra.mxu0 %v796
    %832 = vmatprep.subr.mxu0 0.0
    %833 = vmatpush1.msra.mxu0 %v795
    %834 = vmatprep.subr.mxu0 0.0
    %835 = vmatpush1.msra.mxu0 %v794
    %836 = vmatprep.subr.mxu0 0.0
    %837 = vmatpush1.msra.mxu0 %v793
    %838 = vmatprep.subr.mxu0 0.0
    %839 = vmatpush1.msra.mxu0 %v792
    %840 = vmatprep.subr.mxu0 0.0
    %841 = vmatpush2.msra.mxu0 0.0
    %842 = vmatprep.subr.mxu0 0.0
    %843 = vmatpush2.msra.mxu0 0.0
    %844 = vmatprep.subr.mxu0 0.0
    %845 = vmatpush2.msra.mxu0 0.0
    %846 = vmatprep.subr.mxu0 0.0
    %847 = vmatpush2.msra.mxu0 0.0
    %848 = vmatprep.subr.mxu0 0.0
    %849 = vmatpush2.msra.mxu0 0.0
    %850 = vmatprep.subr.mxu0 0.0
    %851 = vmatpush2.msra.mxu0 0.0
    %852 = vmatprep.subr.mxu0 0.0
    %853 = vmatpush2.msra.mxu0 0.0
    %854 = vmatprep.subr.mxu0 0.0
    %855 = vmatpush2.msra.mxu0 0.0
    %856 = vmatprep.subr.mxu0 0.0
    %857 = vmatpush2.msra.mxu0 0.0
    %858 = vmatprep.subr.mxu0 0.0
    %859 = vmatpush2.msra.mxu0 0.0
    %860 = vmatprep.subr.mxu0 0.0
    %861 = vmatpush2.msra.mxu0 0.0
    %862 = vmatprep.subr.mxu0 0.0
    %863 = vmatpush2.msra.mxu0 0.0
    %864 = vmatprep.subr.mxu0 0.0
    %865 = vmatpush2.msra.mxu0 0.0
    %866 = vmatprep.subr.mxu0 0.0
    %867 = vmatpush2.msra.mxu0 0.0
    %868 = vmatprep.subr.mxu0 0.0
    %869 = vmatpush2.msra.mxu0 0.0
    %870 = vmatprep.subr.mxu0 0.0
    %871 = vmatpush2.msra.mxu0 0.0
    %872 = vmatprep.mubr.f32.mxu0 0.0
    %873 = vmatmul.mubr.f32.gmra.mxu0 %v779
    %v874 = vpop.f32.mrf.mxu0
    %v875 = vadd.f32 0.0, %v874
    %v876 = vpop.f32.mrf.mxu0
    %877 = vdwg.mxu0
    %v878 = vmul.f32 %v875, 0.0078125
    %879 = vmatprep.subr.mxu0 0.0
    %880 = vmatpush1.msra.mxu0 %v807
    %881 = vmatprep.subr.mxu0 0.0
    %882 = vmatpush1.msra.mxu0 %v806
    %883 = vmatprep.subr.mxu0 0.0
    %884 = vmatpush1.msra.mxu0 %v805
    %885 = vmatprep.subr.mxu0 0.0
    %886 = vmatpush1.msra.mxu0 %v804
    %887 = vmatprep.subr.mxu0 0.0
    %888 = vmatpush1.msra.mxu0 %v803
    %889 = vmatprep.subr.mxu0 0.0
    %890 = vmatpush1.msra.mxu0 %v802
    %891 = vmatprep.subr.mxu0 0.0
    %892 = vmatpush1.msra.mxu0 %v801
    %893 = vmatprep.subr.mxu0 0.0
    %894 = vmatpush1.msra.mxu0 %v800
    %895 = vmatprep.subr.mxu0 0.0
    %896 = vmatpush1.msra.mxu0 %v799
    %897 = vmatprep.subr.mxu0 0.0
    %898 = vmatpush1.msra.mxu0 %v798
    %899 = vmatprep.subr.mxu0 0.0
    %900 = vmatpush1.msra.mxu0 %v797
    %901 = vmatprep.subr.mxu0 0.0
    %902 = vmatpush1.msra.mxu0 %v796
    %903 = vmatprep.subr.mxu0 0.0
    %904 = vmatpush1.msra.mxu0 %v795
    %905 = vmatprep.subr.mxu0 0.0
    %906 = vmatpush1.msra.mxu0 %v794
    %907 = vmatprep.subr.mxu0 0.0
    %908 = vmatpush1.msra.mxu0 %v793
    %909 = vmatprep.subr.mxu0 0.0
    %910 = vmatpush1.msra.mxu0 %v792
    %911 = vmatprep.subr.mxu0 0.0
    %912 = vmatpush2.msra.mxu0 0.0
    %913 = vmatprep.subr.mxu0 0.0
    %914 = vmatpush2.msra.mxu0 0.0
    %915 = vmatprep.subr.mxu0 0.0
    %916 = vmatpush2.msra.mxu0 0.0
    %917 = vmatprep.subr.mxu0 0.0
    %918 = vmatpush2.msra.mxu0 0.0
    %919 = vmatprep.subr.mxu0 0.0
    %920 = vmatpush2.msra.mxu0 0.0
    %921 = vmatprep.subr.mxu0 0.0
    %922 = vmatpush2.msra.mxu0 0.0
    %923 = vmatprep.subr.mxu0 0.0
    %924 = vmatpush2.msra.mxu0 0.0
    %925 = vmatprep.subr.mxu0 0.0
    %926 = vmatpush2.msra.mxu0 0.0
    %927 = vmatprep.subr.mxu0 0.0
    %928 = vmatpush2.msra.mxu0 0.0
    %929 = vmatprep.subr.mxu0 0.0
    %930 = vmatpush2.msra.mxu0 0.0
    %931 = vmatprep.subr.mxu0 0.0
    %932 = vmatpush2.msra.mxu0 0.0
    %933 = vmatprep.subr.mxu0 0.0
    %934 = vmatpush2.msra.mxu0 0.0
    %935 = vmatprep.subr.mxu0 0.0
    %936 = vmatpush2.msra.mxu0 0.0
    %937 = vmatprep.subr.mxu0 0.0
    %938 = vmatpush2.msra.mxu0 0.0
    %939 = vmatprep.subr.mxu0 0.0
    %940 = vmatpush2.msra.mxu0 0.0
    %941 = vmatprep.subr.mxu0 0.0
    %942 = vmatpush2.msra.mxu0 0.0
    %943 = vmatprep.mubr.f32.mxu0 0.0
    %944 = vmatmul.mubr.f32.gmra.mxu0 %v791
    %v945 = vpop.f32.mrf.mxu0
    %v946 = vadd.f32 0.0, %v945
    %v947 = vpop.f32.mrf.mxu0
    %948 = vdwg.mxu0
    %v949 = vmul.f32 %v946, 0.0078125
    %v950 = vmul.f32 %v878, %v878
    %v951 = vsub.f32 %v949, %v950
    %v952 = vmax.f32 %v951, 0.0
    %v953 = vld [vmem:[%s7] sm:$0x1]
    %v954 = vadd.f32 %v952, 1e-05
    %v955 = vrsqrt.pop %v954
    %v956 = vmul.f32 %v953, %v955
    %v957 = vld [vmem:[%s8] sm:$0x1]
    %v958 = vmul.f32 %v878, %v956
    %v959 = vsub.f32 %v957, %v958
    %v960 = vld [vmem:[%s14] sm:$0xff]
    %vm961 = vcmask 64512
    %v963 = vsel %vm961, %v956, 0
    %965 = vmatprep.subr.mxu0 0.0
    %966 = vmatpush1.msra.mxu0 0.0
    %967 = vmatprep.subr.mxu0 0.0
    %968 = vmatpush1.msra.mxu0 0.0
    %969 = vmatprep.subr.mxu0 0.0
    %970 = vmatpush1.msra.mxu0 0.0
    %971 = vmatprep.subr.mxu0 0.0
    %972 = vmatpush1.msra.mxu0 0.0
    %973 = vmatprep.subr.mxu0 0.0
    %974 = vmatpush1.msra.mxu0 0.0
    %975 = vmatprep.subr.mxu0 0.0
    %976 = vmatpush1.msra.mxu0 0.0
    %977 = vmatprep.subr.mxu0 0.0
    %978 = vmatpush1.msra.mxu0 0.0
    %979 = vmatprep.subr.mxu0 0.0
    %980 = vmatpush1.msra.mxu0 0.0
    %981 = vmatprep.subr.mxu0 0.0
    %982 = vmatpush1.msra.mxu0 0.0
    %983 = vmatprep.subr.mxu0 0.0
    %984 = vmatpush1.msra.mxu0 0.0
    %985 = vmatprep.subr.mxu0 0.0
    %986 = vmatpush1.msra.mxu0 0.0
    %987 = vmatprep.subr.mxu0 0.0
    %988 = vmatpush1.msra.mxu0 0.0
    %989 = vmatprep.subr.mxu0 0.0
    %990 = vmatpush1.msra.mxu0 0.0
    %991 = vmatprep.subr.mxu0 0.0
    %992 = vmatpush1.msra.mxu0 0.0
    %993 = vmatprep.subr.mxu0 0.0
    %994 = vmatpush1.msra.mxu0 0.0
    %995 = vmatprep.subr.mxu0 0.0
    %996 = vmatpush1.msra.mxu0 %v960
    %997 = vmatprep.subr.mxu0 0.0
    %998 = vmatpush2.msra.mxu0 0.0
    %999 = vmatprep.subr.mxu0 0.0
    %1000 = vmatpush2.msra.mxu0 0.0
    %1001 = vmatprep.subr.mxu0 0.0
    %1002 = vmatpush2.msra.mxu0 0.0
    %1003 = vmatprep.subr.mxu0 0.0
    %1004 = vmatpush2.msra.mxu0 0.0
    %1005 = vmatprep.subr.mxu0 0.0
    %1006 = vmatpush2.msra.mxu0 0.0
    %1007 = vmatprep.subr.mxu0 0.0
    %1008 = vmatpush2.msra.mxu0 0.0
    %1009 = vmatprep.subr.mxu0 0.0
    %1010 = vmatpush2.msra.mxu0 0.0
    %1011 = vmatprep.subr.mxu0 0.0
    %1012 = vmatpush2.msra.mxu0 0.0
    %1013 = vmatprep.subr.mxu0 0.0
    %1014 = vmatpush2.msra.mxu0 0.0
    %1015 = vmatprep.subr.mxu0 0.0
    %1016 = vmatpush2.msra.mxu0 0.0
    %1017 = vmatprep.subr.mxu0 0.0
    %1018 = vmatpush2.msra.mxu0 0.0
    %1019 = vmatprep.subr.mxu0 0.0
    %1020 = vmatpush2.msra.mxu0 0.0
    %1021 = vmatprep.subr.mxu0 0.0
    %1022 = vmatpush2.msra.mxu0 0.0
    %1023 = vmatprep.subr.mxu0 0.0
    %1024 = vmatpush2.msra.mxu0 0.0
    %1025 = vmatprep.subr.mxu0 0.0
    %1026 = vmatpush2.msra.mxu0 0.0
    %1027 = vmatprep.subr.mxu0 0.0
    %1028 = vmatpush2.msra.mxu0 0.0
    %1029 = vmatprep.mubr.f32.mxu0 0.0
    %1030 = vmatmul.mubr.f32.gmra.mxu0 %v963
    %v1031 = vpop.f32.mrf.mxu0
    %v1032 = vadd.f32 0.0, %v1031
    %v1033 = vpop.f32.mrf.mxu0
    %1034 = vdwg.mxu0
    %v1036 = vsel %vm961, %v959, 0
    %1038 = vmatprep.subr.mxu0 0.0
    %1039 = vmatpush1.msra.mxu0 0.0
    %1040 = vmatprep.subr.mxu0 0.0
    %1041 = vmatpush1.msra.mxu0 0.0
    %1042 = vmatprep.subr.mxu0 0.0
    %1043 = vmatpush1.msra.mxu0 0.0
    %1044 = vmatprep.subr.mxu0 0.0
    %1045 = vmatpush1.msra.mxu0 0.0
    %1046 = vmatprep.subr.mxu0 0.0
    %1047 = vmatpush1.msra.mxu0 0.0
    %1048 = vmatprep.subr.mxu0 0.0
    %1049 = vmatpush1.msra.mxu0 0.0
    %1050 = vmatprep.subr.mxu0 0.0
    %1051 = vmatpush1.msra.mxu0 0.0
    %1052 = vmatprep.subr.mxu0 0.0
    %1053 = vmatpush1.msra.mxu0 0.0
    %1054 = vmatprep.subr.mxu0 0.0
    %1055 = vmatpush1.msra.mxu0 0.0
    %1056 = vmatprep.subr.mxu0 0.0
    %1057 = vmatpush1.msra.mxu0 0.0
    %1058 = vmatprep.subr.mxu0 0.0
    %1059 = vmatpush1.msra.mxu0 0.0
    %1060 = vmatprep.subr.mxu0 0.0
    %1061 = vmatpush1.msra.mxu0 0.0
    %1062 = vmatprep.subr.mxu0 0.0
    %1063 = vmatpush1.msra.mxu0 0.0
    %1064 = vmatprep.subr.mxu0 0.0
    %1065 = vmatpush1.msra.mxu0 0.0
    %1066 = vmatprep.subr.mxu0 0.0
    %1067 = vmatpush1.msra.mxu0 0.0
    %1068 = vmatprep.subr.mxu0 0.0
    %1069 = vmatpush1.msra.mxu0 %v960
    %1070 = vmatprep.subr.mxu0 0.0
    %1071 = vmatpush2.msra.mxu0 0.0
    %1072 = vmatprep.subr.mxu0 0.0
    %1073 = vmatpush2.msra.mxu0 0.0
    %1074 = vmatprep.subr.mxu0 0.0
    %1075 = vmatpush2.msra.mxu0 0.0
    %1076 = vmatprep.subr.mxu0 0.0
    %1077 = vmatpush2.msra.mxu0 0.0
    %1078 = vmatprep.subr.mxu0 0.0
    %1079 = vmatpush2.msra.mxu0 0.0
    %1080 = vmatprep.subr.mxu0 0.0
    %1081 = vmatpush2.msra.mxu0 0.0
    %1082 = vmatprep.subr.mxu0 0.0
    %1083 = vmatpush2.msra.mxu0 0.0
    %1084 = vmatprep.subr.mxu0 0.0
    %1085 = vmatpush2.msra.mxu0 0.0
    %1086 = vmatprep.subr.mxu0 0.0
    %1087 = vmatpush2.msra.mxu0 0.0
    %1088 = vmatprep.subr.mxu0 0.0
    %1089 = vmatpush2.msra.mxu0 0.0
    %1090 = vmatprep.subr.mxu0 0.0
    %1091 = vmatpush2.msra.mxu0 0.0
    %1092 = vmatprep.subr.mxu0 0.0
    %1093 = vmatpush2.msra.mxu0 0.0
    %1094 = vmatprep.subr.mxu0 0.0
    %1095 = vmatpush2.msra.mxu0 0.0
    %1096 = vmatprep.subr.mxu0 0.0
    %1097 = vmatpush2.msra.mxu0 0.0
    %1098 = vmatprep.subr.mxu0 0.0
    %1099 = vmatpush2.msra.mxu0 0.0
    %1100 = vmatprep.subr.mxu0 0.0
    %1101 = vmatpush2.msra.mxu0 0.0
    %1102 = vmatprep.mubr.f32.mxu0 0.0
    %1103 = vmatmul.mubr.f32.gmra.mxu0 %v1036
    %v1104 = vpop.f32.mrf.mxu0
    %v1105 = vadd.f32 0.0, %v1104
    %v1106 = vpop.f32.mrf.mxu0
    %1107 = vdwg.mxu0
    %v1108 = vlaneseq
    %v1109 = vshrl.u32 %v1108, 7
    %v1110 = vsub.s32 0, %v1109
    %v1111 = vrot.slane %v1032, %v1110
    %v1112 = vmul.f32 %v768, %v1111
    %v1113 = vmul.f32 %v769, %v1111
    %v1114 = vlaneseq
    %v1115 = vshrl.u32 %v1114, 7
    %v1116 = vsub.s32 0, %v1115
    %v1117 = vrot.slane %v1105, %v1116
    %v1118 = vadd.f32 %v1112, %v1117
    %v1119 = vadd.f32 %v1113, %v1117
    %v1120 = vmax.f32 %v1118, 0.0
    %v1121 = vmax.f32 %v1119, 0.0
    %v1124 = vcombine.low %v1120, %v1121
    %v1126 = vpack.c.bf16 %v1124, %v1124
    %v1127 = vld [vmem:[#allocation7] sm:$0xff]
    %v1128 = vld [vmem:[#allocation7 + $0x8] sm:$0xf]
    %v1129 = vld [vmem:[#allocation7 + $0xc] sm:$0xff]
    %v1130 = vld [vmem:[#allocation7 + $0x14] sm:$0xf]
    %v1131 = vld [vmem:[#allocation7 + $0x18] sm:$0xff]
    %v1132 = vld [vmem:[#allocation7 + $0x20] sm:$0xf]
    %v1133 = vld [vmem:[#allocation7 + $0x24] sm:$0xff]
    %v1134 = vld [vmem:[#allocation7 + $0x2c] sm:$0xf]
    %v1135 = vld [vmem:[#allocation7 + $0x30] sm:$0xff]
    %v1136 = vld [vmem:[#allocation7 + $0x38] sm:$0xf]
    %v1137 = vld [vmem:[#allocation7 + $0x3c] sm:$0xff]
    %v1138 = vld [vmem:[#allocation7 + $0x44] sm:$0xf]
    %v1139 = vld [vmem:[#allocation7 + $0x48] sm:$0xff]
    %v1140 = vld [vmem:[#allocation7 + $0x50] sm:$0xf]
    %v1141 = vld [vmem:[#allocation7 + $0x54] sm:$0xff]
    %v1142 = vld [vmem:[#allocation7 + $0x5c] sm:$0xf]
    %v1143 = vld [vmem:[#allocation7 + $0x60] sm:$0xff]
    %v1144 = vld [vmem:[#allocation7 + $0x68] sm:$0xf]
    %v1145 = vld [vmem:[#allocation7 + $0x6c] sm:$0xff]
    %v1146 = vld [vmem:[#allocation7 + $0x74] sm:$0xf]
    %v1147 = vld [vmem:[#allocation7 + $0x78] sm:$0xff]
    %v1148 = vld [vmem:[#allocation7 + $0x80] sm:$0xf]
    %v1149 = vld [vmem:[#allocation7 + $0x84] sm:$0xff]
    %v1150 = vld [vmem:[#allocation7 + $0x8c] sm:$0xf]
    %v1151 = vld [vmem:[#allocation7 + $0x90] sm:$0xff]
    %v1152 = vld [vmem:[#allocation7 + $0x98] sm:$0xf]
    %v1153 = vld [vmem:[#allocation7 + $0x9c] sm:$0xff]
    %v1154 = vld [vmem:[#allocation7 + $0xa4] sm:$0xf]
    %v1155 = vld [vmem:[#allocation7 + $0xa8] sm:$0xff]
    %v1156 = vld [vmem:[#allocation7 + $0xb0] sm:$0xf]
    %v1157 = vld [vmem:[#allocation7 + $0xb4] sm:$0xff]
    %v1158 = vld [vmem:[#allocation7 + $0xbc] sm:$0xf]
    %v1191 = vunpack.c.l.b16 %v1127
    %v1192 = vunpack.c.h.b16 %v1127
    %v1193 = vunpack.c.l.b16 %v1128
    %v1194 = vunpack.c.l.b16 %v1129
    %v1195 = vunpack.c.h.b16 %v1129
    %v1196 = vunpack.c.l.b16 %v1130
    %v1197 = vunpack.c.l.b16 %v1131
    %v1198 = vunpack.c.h.b16 %v1131
    %v1199 = vunpack.c.l.b16 %v1132
    %v1200 = vunpack.c.l.b16 %v1133
    %v1201 = vunpack.c.h.b16 %v1133
    %v1202 = vunpack.c.l.b16 %v1134
    %v1203 = vunpack.c.l.b16 %v1135
    %v1204 = vunpack.c.h.b16 %v1135
    %v1205 = vunpack.c.l.b16 %v1136
    %v1206 = vunpack.c.l.b16 %v1137
    %v1207 = vunpack.c.h.b16 %v1137
    %v1208 = vunpack.c.l.b16 %v1138
    %v1209 = vunpack.c.l.b16 %v1139
    %v1210 = vunpack.c.h.b16 %v1139
    %v1211 = vunpack.c.l.b16 %v1140
    %v1212 = vunpack.c.l.b16 %v1141
    %v1213 = vunpack.c.h.b16 %v1141
    %v1214 = vunpack.c.l.b16 %v1142
    %v1215 = vunpack.c.l.b16 %v1143
    %v1216 = vunpack.c.h.b16 %v1143
    %v1217 = vunpack.c.l.b16 %v1144
    %v1218 = vunpack.c.l.b16 %v1145
    %v1219 = vunpack.c.h.b16 %v1145
    %v1220 = vunpack.c.l.b16 %v1146
    %v1221 = vunpack.c.l.b16 %v1147
    %v1222 = vunpack.c.h.b16 %v1147
    %v1223 = vunpack.c.l.b16 %v1148
    %v1224 = vunpack.c.l.b16 %v1149
    %v1225 = vunpack.c.h.b16 %v1149
    %v1226 = vunpack.c.l.b16 %v1150
    %v1227 = vunpack.c.l.b16 %v1151
    %v1228 = vunpack.c.h.b16 %v1151
    %v1229 = vunpack.c.l.b16 %v1152
    %v1230 = vunpack.c.l.b16 %v1153
    %v1231 = vunpack.c.h.b16 %v1153
    %v1232 = vunpack.c.l.b16 %v1154
    %v1233 = vunpack.c.l.b16 %v1155
    %v1234 = vunpack.c.h.b16 %v1155
    %v1235 = vunpack.c.l.b16 %v1156
    %v1236 = vunpack.c.l.b16 %v1157
    %v1237 = vunpack.c.h.b16 %v1157
    %v1238 = vunpack.c.l.b16 %v1158
    %v1239 = vpack.c.b16 %v1194, %v1191
    %v1240 = vpack.c.b16 %v1195, %v1192
    %v1241 = vpack.c.b16 %v1196, %v1193
    %v1242 = vpack.c.b16 %v1200, %v1197
    %v1243 = vpack.c.b16 %v1201, %v1198
    %v1244 = vpack.c.b16 %v1202, %v1199
    %v1245 = vpack.c.b16 %v1206, %v1203
    %v1246 = vpack.c.b16 %v1207, %v1204
    %v1247 = vpack.c.b16 %v1208, %v1205
    %v1248 = vpack.c.b16 %v1212, %v1209
    %v1249 = vpack.c.b16 %v1213, %v1210
    %v1250 = vpack.c.b16 %v1214, %v1211
    %v1251 = vpack.c.b16 %v1218, %v1215
    %v1252 = vpack.c.b16 %v1219, %v1216
    %v1253 = vpack.c.b16 %v1220, %v1217
    %v1254 = vpack.c.b16 %v1224, %v1221
    %v1255 = vpack.c.b16 %v1225, %v1222
    %v1256 = vpack.c.b16 %v1226, %v1223
    %v1257 = vpack.c.b16 %v1230, %v1227
    %v1258 = vpack.c.b16 %v1231, %v1228
    %v1259 = vpack.c.b16 %v1232, %v1229
    %v1260 = vpack.c.b16 %v1236, %v1233
    %v1261 = vpack.c.b16 %v1237, %v1234
    %v1262 = vpack.c.b16 %v1238, %v1235
    %1287 = vmatprep.subr.bf16.mxu0 %v1261
    %1288 = vmatpush1.bf16.msra.mxu0 %v1260
    %1289 = vmatprep.subr.bf16.mxu0 %v1258
    %1290 = vmatpush1.bf16.msra.mxu0 %v1257
    %1291 = vmatprep.subr.bf16.mxu0 %v1255
    %1292 = vmatpush1.bf16.msra.mxu0 %v1254
    %1293 = vmatprep.subr.bf16.mxu0 %v1252
    %1294 = vmatpush1.bf16.msra.mxu0 %v1251
    %1295 = vmatprep.subr.bf16.mxu0 %v1249
    %1296 = vmatpush1.bf16.msra.mxu0 %v1248
    %1297 = vmatprep.subr.bf16.mxu0 %v1246
    %1298 = vmatpush1.bf16.msra.mxu0 %v1245
    %1299 = vmatprep.subr.bf16.mxu0 %v1243
    %1300 = vmatpush1.bf16.msra.mxu0 %v1242
    %1301 = vmatprep.subr.bf16.mxu0 %v1240
    %1302 = vmatpush1.bf16.msra.mxu0 %v1239
    %1303 = vmatprep.subr.bf16.mxu0 0
    %1304 = vmatpush2.bf16.msra.mxu0 0
    %1305 = vmatprep.subr.bf16.mxu0 0
    %1306 = vmatpush2.bf16.msra.mxu0 0
    %1307 = vmatprep.subr.bf16.mxu0 0
    %1308 = vmatpush2.bf16.msra.mxu0 0
    %1309 = vmatprep.subr.bf16.mxu0 0
    %1310 = vmatpush2.bf16.msra.mxu0 0
    %1311 = vmatprep.subr.bf16.mxu0 0
    %1312 = vmatpush2.bf16.msra.mxu0 0
    %1313 = vmatprep.subr.bf16.mxu0 0
    %1314 = vmatpush2.bf16.msra.mxu0 0
    %1315 = vmatprep.subr.bf16.mxu0 0
    %1316 = vmatpush2.bf16.msra.mxu0 0
    %1317 = vmatprep.subr.bf16.mxu0 0
    %1318 = vmatpush2.bf16.msra.mxu0 0
    %1319 = vmatprep.mubr.bf16.mxu0 0
    %1320 = vmatmul.mubr.bf16.gmra.mxu0 %v1126
    %v1321 = vpop.f32.mrf.mxu0
    %v1322 = vadd.f32 0.0, %v1321
    %v1323 = vpop.f32.mrf.mxu0
    %v1324 = vadd.f32 0.0, %v1323
    %v1325 = vpop.f32.mrf.mxu0
    %v1326 = vpop.f32.mrf.mxu0
    %1327 = vdwg.mxu0
    %1328 = vmatprep.subr.bf16.mxu0 0
    %1329 = vmatpush1.bf16.msra.mxu0 %v1262
    %1330 = vmatprep.subr.bf16.mxu0 0
    %1331 = vmatpush1.bf16.msra.mxu0 %v1259
    %1332 = vmatprep.subr.bf16.mxu0 0
    %1333 = vmatpush1.bf16.msra.mxu0 %v1256
    %1334 = vmatprep.subr.bf16.mxu0 0
    %1335 = vmatpush1.bf16.msra.mxu0 %v1253
    %1336 = vmatprep.subr.bf16.mxu0 0
    %1337 = vmatpush1.bf16.msra.mxu0 %v1250
    %1338 = vmatprep.subr.bf16.mxu0 0
    %1339 = vmatpush1.bf16.msra.mxu0 %v1247
    %1340 = vmatprep.subr.bf16.mxu0 0
    %1341 = vmatpush1.bf16.msra.mxu0 %v1244
    %1342 = vmatprep.subr.bf16.mxu0 0
    %1343 = vmatpush1.bf16.msra.mxu0 %v1241
    %1344 = vmatprep.subr.bf16.mxu0 0
    %1345 = vmatpush2.bf16.msra.mxu0 0
    %1346 = vmatprep.subr.bf16.mxu0 0
    %1347 = vmatpush2.bf16.msra.mxu0 0
    %1348 = vmatprep.subr.bf16.mxu0 0
    %1349 = vmatpush2.bf16.msra.mxu0 0
    %1350 = vmatprep.subr.bf16.mxu0 0
    %1351 = vmatpush2.bf16.msra.mxu0 0
    %1352 = vmatprep.subr.bf16.mxu0 0
    %1353 = vmatpush2.bf16.msra.mxu0 0
    %1354 = vmatprep.subr.bf16.mxu0 0
    %1355 = vmatpush2.bf16.msra.mxu0 0
    %1356 = vmatprep.subr.bf16.mxu0 0
    %1357 = vmatpush2.bf16.msra.mxu0 0
    %1358 = vmatprep.subr.bf16.mxu0 0
    %1359 = vmatpush2.bf16.msra.mxu0 0
    %1360 = vmatprep.mubr.bf16.mxu0 0
    %1361 = vmatmul.mubr.bf16.gmra.mxu0 %v1126
    %v1362 = vpop.f32.mrf.mxu0
    %v1363 = vadd.f32 0.0, %v1362
    %v1364 = vpop.f32.mrf.mxu0
    %v1365 = vpop.f32.mrf.mxu0
    %v1366 = vpop.f32.mrf.mxu0
    %1367 = vdwg.mxu0
    %v1371 = vcombine.low %v1322, %v1324
    %v1372 = vcombine.high %v1322, %v1324
    %v1373 = vcombine.high %v1363, %v1363
    %v1374 = vld [vmem:[%s10] sm:$0x1]
    %v1375 = vrot.slane %v1371, 7
    %v1376 = vrot.slane %v1372, 7
    %v1379 = vsel %vm742, 0.0, %v1375
    %v1380 = vsel %vm742, 0.0, %v1376
    %v1381 = vrot.slane %v1371, 4
    %v1382 = vrot.slane %v1372, 4
    %v1385 = vadd.f32 %v1381, %v1379
    %v1386 = vadd.f32 %v1382, %v1380
    %v1387 = vrot.slane %v1363, 1
    %v1388 = vrot.slane %v1373, 1
    %v1391 = vsel %vm757, %v1387, 0.0
    %v1392 = vsel %vm757, %v1388, 0.0
    %v1393 = vadd.f32 %v1385, %v1391
    %v1394 = vadd.f32 %v1386, %v1392
    %v1396 = vlaneseq
    %v1397 = vshrl.u32 %v1396, 7
    %v1398 = vsub.s32 0, %v1397
    %v1399 = vrot.slane %v1374, %v1398
    %v1401 = vadd.f32 %v1393, %v1399
    %v1402 = vadd.f32 %v1394, %v1399
    %v1405 = vcombine.low %v1401, %v1402
    %v1407 = vrot.slane %v1405, 4
    %v1408 = vadd.f32 %v1405, %v1407
    %v1409 = vrot.slane %v1408, 2
    %v1410 = vadd.f32 %v1408, %v1409
    %v1411 = vrot.slane %v1410, 1
    %v1412 = vadd.f32 %v1410, %v1411
    %v1413 = vmul.f32 %v1401, %v1401
    %v1414 = vmul.f32 %v1402, %v1402
    %v1417 = vcombine.low %v1413, %v1414
    %v1419 = vrot.slane %v1417, 4
    %v1420 = vadd.f32 %v1417, %v1419
    %v1421 = vrot.slane %v1420, 2
    %v1422 = vadd.f32 %v1420, %v1421
    %v1423 = vrot.slane %v1422, 1
    %v1424 = vadd.f32 %v1422, %v1423
    %1425 = vmatprep.subr.mxu0 0.0
    %1426 = vmatpush1.msra.mxu0 %v807
    %1427 = vmatprep.subr.mxu0 0.0
    %1428 = vmatpush1.msra.mxu0 %v806
    %1429 = vmatprep.subr.mxu0 0.0
    %1430 = vmatpush1.msra.mxu0 %v805
    %1431 = vmatprep.subr.mxu0 0.0
    %1432 = vmatpush1.msra.mxu0 %v804
    %1433 = vmatprep.subr.mxu0 0.0
    %1434 = vmatpush1.msra.mxu0 %v803
    %1435 = vmatprep.subr.mxu0 0.0
    %1436 = vmatpush1.msra.mxu0 %v802
    %1437 = vmatprep.subr.mxu0 0.0
    %1438 = vmatpush1.msra.mxu0 %v801
    %1439 = vmatprep.subr.mxu0 0.0
    %1440 = vmatpush1.msra.mxu0 %v800
    %1441 = vmatprep.subr.mxu0 0.0
    %1442 = vmatpush1.msra.mxu0 %v799
    %1443 = vmatprep.subr.mxu0 0.0
    %1444 = vmatpush1.msra.mxu0 %v798
    %1445 = vmatprep.subr.mxu0 0.0
    %1446 = vmatpush1.msra.mxu0 %v797
    %1447 = vmatprep.subr.mxu0 0.0
    %1448 = vmatpush1.msra.mxu0 %v796
    %1449 = vmatprep.subr.mxu0 0.0
    %1450 = vmatpush1.msra.mxu0 %v795
    %1451 = vmatprep.subr.mxu0 0.0
    %1452 = vmatpush1.msra.mxu0 %v794
    %1453 = vmatprep.subr.mxu0 0.0
    %1454 = vmatpush1.msra.mxu0 %v793
    %1455 = vmatprep.subr.mxu0 0.0
    %1456 = vmatpush1.msra.mxu0 %v792
    %1457 = vmatprep.subr.mxu0 0.0
    %1458 = vmatpush2.msra.mxu0 0.0
    %1459 = vmatprep.subr.mxu0 0.0
    %1460 = vmatpush2.msra.mxu0 0.0
    %1461 = vmatprep.subr.mxu0 0.0
    %1462 = vmatpush2.msra.mxu0 0.0
    %1463 = vmatprep.subr.mxu0 0.0
    %1464 = vmatpush2.msra.mxu0 0.0
    %1465 = vmatprep.subr.mxu0 0.0
    %1466 = vmatpush2.msra.mxu0 0.0
    %1467 = vmatprep.subr.mxu0 0.0
    %1468 = vmatpush2.msra.mxu0 0.0
    %1469 = vmatprep.subr.mxu0 0.0
    %1470 = vmatpush2.msra.mxu0 0.0
    %1471 = vmatprep.subr.mxu0 0.0
    %1472 = vmatpush2.msra.mxu0 0.0
    %1473 = vmatprep.subr.mxu0 0.0
    %1474 = vmatpush2.msra.mxu0 0.0
    %1475 = vmatprep.subr.mxu0 0.0
    %1476 = vmatpush2.msra.mxu0 0.0
    %1477 = vmatprep.subr.mxu0 0.0
    %1478 = vmatpush2.msra.mxu0 0.0
    %1479 = vmatprep.subr.mxu0 0.0
    %1480 = vmatpush2.msra.mxu0 0.0
    %1481 = vmatprep.subr.mxu0 0.0
    %1482 = vmatpush2.msra.mxu0 0.0
    %1483 = vmatprep.subr.mxu0 0.0
    %1484 = vmatpush2.msra.mxu0 0.0
    %1485 = vmatprep.subr.mxu0 0.0
    %1486 = vmatpush2.msra.mxu0 0.0
    %1487 = vmatprep.subr.mxu0 0.0
    %1488 = vmatpush2.msra.mxu0 0.0
    %1489 = vmatprep.mubr.f32.mxu0 0.0
    %1490 = vmatmul.mubr.f32.gmra.mxu0 %v1412
    %v1491 = vpop.f32.mrf.mxu0
    %v1492 = vadd.f32 0.0, %v1491
    %v1493 = vpop.f32.mrf.mxu0
    %1494 = vdwg.mxu0
    %v1495 = vmul.f32 %v1492, 0.0078125
    %1496 = vmatprep.subr.mxu0 0.0
    %1497 = vmatpush1.msra.mxu0 %v807
    %1498 = vmatprep.subr.mxu0 0.0
    %1499 = vmatpush1.msra.mxu0 %v806
    %1500 = vmatprep.subr.mxu0 0.0
    %1501 = vmatpush1.msra.mxu0 %v805
    %1502 = vmatprep.subr.mxu0 0.0
    %1503 = vmatpush1.msra.mxu0 %v804
    %1504 = vmatprep.subr.mxu0 0.0
    %1505 = vmatpush1.msra.mxu0 %v803
    %1506 = vmatprep.subr.mxu0 0.0
    %1507 = vmatpush1.msra.mxu0 %v802
    %1508 = vmatprep.subr.mxu0 0.0
    %1509 = vmatpush1.msra.mxu0 %v801
    %1510 = vmatprep.subr.mxu0 0.0
    %1511 = vmatpush1.msra.mxu0 %v800
    %1512 = vmatprep.subr.mxu0 0.0
    %1513 = vmatpush1.msra.mxu0 %v799
    %1514 = vmatprep.subr.mxu0 0.0
    %1515 = vmatpush1.msra.mxu0 %v798
    %1516 = vmatprep.subr.mxu0 0.0
    %1517 = vmatpush1.msra.mxu0 %v797
    %1518 = vmatprep.subr.mxu0 0.0
    %1519 = vmatpush1.msra.mxu0 %v796
    %1520 = vmatprep.subr.mxu0 0.0
    %1521 = vmatpush1.msra.mxu0 %v795
    %1522 = vmatprep.subr.mxu0 0.0
    %1523 = vmatpush1.msra.mxu0 %v794
    %1524 = vmatprep.subr.mxu0 0.0
    %1525 = vmatpush1.msra.mxu0 %v793
    %1526 = vmatprep.subr.mxu0 0.0
    %1527 = vmatpush1.msra.mxu0 %v792
    %1528 = vmatprep.subr.mxu0 0.0
    %1529 = vmatpush2.msra.mxu0 0.0
    %1530 = vmatprep.subr.mxu0 0.0
    %1531 = vmatpush2.msra.mxu0 0.0
    %1532 = vmatprep.subr.mxu0 0.0
    %1533 = vmatpush2.msra.mxu0 0.0
    %1534 = vmatprep.subr.mxu0 0.0
    %1535 = vmatpush2.msra.mxu0 0.0
    %1536 = vmatprep.subr.mxu0 0.0
    %1537 = vmatpush2.msra.mxu0 0.0
    %1538 = vmatprep.subr.mxu0 0.0
    %1539 = vmatpush2.msra.mxu0 0.0
    %1540 = vmatprep.subr.mxu0 0.0
    %1541 = vmatpush2.msra.mxu0 0.0
    %1542 = vmatprep.subr.mxu0 0.0
    %1543 = vmatpush2.msra.mxu0 0.0
    %1544 = vmatprep.subr.mxu0 0.0
    %1545 = vmatpush2.msra.mxu0 0.0
    %1546 = vmatprep.subr.mxu0 0.0
    %1547 = vmatpush2.msra.mxu0 0.0
    %1548 = vmatprep.subr.mxu0 0.0
    %1549 = vmatpush2.msra.mxu0 0.0
    %1550 = vmatprep.subr.mxu0 0.0
    %1551 = vmatpush2.msra.mxu0 0.0
    %1552 = vmatprep.subr.mxu0 0.0
    %1553 = vmatpush2.msra.mxu0 0.0
    %1554 = vmatprep.subr.mxu0 0.0
    %1555 = vmatpush2.msra.mxu0 0.0
    %1556 = vmatprep.subr.mxu0 0.0
    %1557 = vmatpush2.msra.mxu0 0.0
    %1558 = vmatprep.subr.mxu0 0.0
    %1559 = vmatpush2.msra.mxu0 0.0
    %1560 = vmatprep.mubr.f32.mxu0 0.0
    %1561 = vmatmul.mubr.f32.gmra.mxu0 %v1424
    %v1562 = vpop.f32.mrf.mxu0
    %v1563 = vadd.f32 0.0, %v1562
    %v1564 = vpop.f32.mrf.mxu0
    %1565 = vdwg.mxu0
    %v1566 = vmul.f32 %v1563, 0.0078125
    %v1567 = vmul.f32 %v1495, %v1495
    %v1568 = vsub.f32 %v1566, %v1567
    %v1569 = vmax.f32 %v1568, 0.0
    %v1570 = vld [vmem:[%s11] sm:$0x1]
    %v1571 = vadd.f32 %v1569, 1e-05
    %v1572 = vrsqrt.pop %v1571
    %v1573 = vmul.f32 %v1570, %v1572
    %v1574 = vld [vmem:[%s12] sm:$0x1]
    %v1575 = vmul.f32 %v1495, %v1573
    %v1576 = vsub.f32 %v1574, %v1575
    %v1578 = vsel %vm961, %v1573, 0
    %1580 = vmatprep.subr.mxu0 0.0
    %1581 = vmatpush1.msra.mxu0 0.0
    %1582 = vmatprep.subr.mxu0 0.0
    %1583 = vmatpush1.msra.mxu0 0.0
    %1584 = vmatprep.subr.mxu0 0.0
    %1585 = vmatpush1.msra.mxu0 0.0
    %1586 = vmatprep.subr.mxu0 0.0
    %1587 = vmatpush1.msra.mxu0 0.0
    %1588 = vmatprep.subr.mxu0 0.0
    %1589 = vmatpush1.msra.mxu0 0.0
    %1590 = vmatprep.subr.mxu0 0.0
    %1591 = vmatpush1.msra.mxu0 0.0
    %1592 = vmatprep.subr.mxu0 0.0
    %1593 = vmatpush1.msra.mxu0 0.0
    %1594 = vmatprep.subr.mxu0 0.0
    %1595 = vmatpush1.msra.mxu0 0.0
    %1596 = vmatprep.subr.mxu0 0.0
    %1597 = vmatpush1.msra.mxu0 0.0
    %1598 = vmatprep.subr.mxu0 0.0
    %1599 = vmatpush1.msra.mxu0 0.0
    %1600 = vmatprep.subr.mxu0 0.0
    %1601 = vmatpush1.msra.mxu0 0.0
    %1602 = vmatprep.subr.mxu0 0.0
    %1603 = vmatpush1.msra.mxu0 0.0
    %1604 = vmatprep.subr.mxu0 0.0
    %1605 = vmatpush1.msra.mxu0 0.0
    %1606 = vmatprep.subr.mxu0 0.0
    %1607 = vmatpush1.msra.mxu0 0.0
    %1608 = vmatprep.subr.mxu0 0.0
    %1609 = vmatpush1.msra.mxu0 0.0
    %1610 = vmatprep.subr.mxu0 0.0
    %1611 = vmatpush1.msra.mxu0 %v960
    %1612 = vmatprep.subr.mxu0 0.0
    %1613 = vmatpush2.msra.mxu0 0.0
    %1614 = vmatprep.subr.mxu0 0.0
    %1615 = vmatpush2.msra.mxu0 0.0
    %1616 = vmatprep.subr.mxu0 0.0
    %1617 = vmatpush2.msra.mxu0 0.0
    %1618 = vmatprep.subr.mxu0 0.0
    %1619 = vmatpush2.msra.mxu0 0.0
    %1620 = vmatprep.subr.mxu0 0.0
    %1621 = vmatpush2.msra.mxu0 0.0
    %1622 = vmatprep.subr.mxu0 0.0
    %1623 = vmatpush2.msra.mxu0 0.0
    %1624 = vmatprep.subr.mxu0 0.0
    %1625 = vmatpush2.msra.mxu0 0.0
    %1626 = vmatprep.subr.mxu0 0.0
    %1627 = vmatpush2.msra.mxu0 0.0
    %1628 = vmatprep.subr.mxu0 0.0
    %1629 = vmatpush2.msra.mxu0 0.0
    %1630 = vmatprep.subr.mxu0 0.0
    %1631 = vmatpush2.msra.mxu0 0.0
    %1632 = vmatprep.subr.mxu0 0.0
    %1633 = vmatpush2.msra.mxu0 0.0
    %1634 = vmatprep.subr.mxu0 0.0
    %1635 = vmatpush2.msra.mxu0 0.0
    %1636 = vmatprep.subr.mxu0 0.0
    %1637 = vmatpush2.msra.mxu0 0.0
    %1638 = vmatprep.subr.mxu0 0.0
    %1639 = vmatpush2.msra.mxu0 0.0
    %1640 = vmatprep.subr.mxu0 0.0
    %1641 = vmatpush2.msra.mxu0 0.0
    %1642 = vmatprep.subr.mxu0 0.0
    %1643 = vmatpush2.msra.mxu0 0.0
    %1644 = vmatprep.mubr.f32.mxu0 0.0
    %1645 = vmatmul.mubr.f32.gmra.mxu0 %v1578
    %v1646 = vpop.f32.mrf.mxu0
    %v1647 = vadd.f32 0.0, %v1646
    %v1648 = vpop.f32.mrf.mxu0
    %1649 = vdwg.mxu0
    %v1651 = vsel %vm961, %v1576, 0
    %1653 = vmatprep.subr.mxu0 0.0
    %1654 = vmatpush1.msra.mxu0 0.0
    %1655 = vmatprep.subr.mxu0 0.0
    %1656 = vmatpush1.msra.mxu0 0.0
    %1657 = vmatprep.subr.mxu0 0.0
    %1658 = vmatpush1.msra.mxu0 0.0
    %1659 = vmatprep.subr.mxu0 0.0
    %1660 = vmatpush1.msra.mxu0 0.0
    %1661 = vmatprep.subr.mxu0 0.0
    %1662 = vmatpush1.msra.mxu0 0.0
    %1663 = vmatprep.subr.mxu0 0.0
    %1664 = vmatpush1.msra.mxu0 0.0
    %1665 = vmatprep.subr.mxu0 0.0
    %1666 = vmatpush1.msra.mxu0 0.0
    %1667 = vmatprep.subr.mxu0 0.0
    %1668 = vmatpush1.msra.mxu0 0.0
    %1669 = vmatprep.subr.mxu0 0.0
    %1670 = vmatpush1.msra.mxu0 0.0
    %1671 = vmatprep.subr.mxu0 0.0
    %1672 = vmatpush1.msra.mxu0 0.0
    %1673 = vmatprep.subr.mxu0 0.0
    %1674 = vmatpush1.msra.mxu0 0.0
    %1675 = vmatprep.subr.mxu0 0.0
    %1676 = vmatpush1.msra.mxu0 0.0
    %1677 = vmatprep.subr.mxu0 0.0
    %1678 = vmatpush1.msra.mxu0 0.0
    %1679 = vmatprep.subr.mxu0 0.0
    %1680 = vmatpush1.msra.mxu0 0.0
    %1681 = vmatprep.subr.mxu0 0.0
    %1682 = vmatpush1.msra.mxu0 0.0
    %1683 = vmatprep.subr.mxu0 0.0
    %1684 = vmatpush1.msra.mxu0 %v960
    %1685 = vmatprep.subr.mxu0 0.0
    %1686 = vmatpush2.msra.mxu0 0.0
    %1687 = vmatprep.subr.mxu0 0.0
    %1688 = vmatpush2.msra.mxu0 0.0
    %1689 = vmatprep.subr.mxu0 0.0
    %1690 = vmatpush2.msra.mxu0 0.0
    %1691 = vmatprep.subr.mxu0 0.0
    %1692 = vmatpush2.msra.mxu0 0.0
    %1693 = vmatprep.subr.mxu0 0.0
    %1694 = vmatpush2.msra.mxu0 0.0
    %1695 = vmatprep.subr.mxu0 0.0
    %1696 = vmatpush2.msra.mxu0 0.0
    %1697 = vmatprep.subr.mxu0 0.0
    %1698 = vmatpush2.msra.mxu0 0.0
    %1699 = vmatprep.subr.mxu0 0.0
    %1700 = vmatpush2.msra.mxu0 0.0
    %1701 = vmatprep.subr.mxu0 0.0
    %1702 = vmatpush2.msra.mxu0 0.0
    %1703 = vmatprep.subr.mxu0 0.0
    %1704 = vmatpush2.msra.mxu0 0.0
    %1705 = vmatprep.subr.mxu0 0.0
    %1706 = vmatpush2.msra.mxu0 0.0
    %1707 = vmatprep.subr.mxu0 0.0
    %1708 = vmatpush2.msra.mxu0 0.0
    %1709 = vmatprep.subr.mxu0 0.0
    %1710 = vmatpush2.msra.mxu0 0.0
    %1711 = vmatprep.subr.mxu0 0.0
    %1712 = vmatpush2.msra.mxu0 0.0
    %1713 = vmatprep.subr.mxu0 0.0
    %1714 = vmatpush2.msra.mxu0 0.0
    %1715 = vmatprep.subr.mxu0 0.0
    %1716 = vmatpush2.msra.mxu0 0.0
    %1717 = vmatprep.mubr.f32.mxu0 0.0
    %1718 = vmatmul.mubr.f32.gmra.mxu0 %v1651
    %v1719 = vpop.f32.mrf.mxu0
    %v1720 = vadd.f32 0.0, %v1719
    %v1721 = vpop.f32.mrf.mxu0
    %1722 = vdwg.mxu0
    %v1723 = vlaneseq
    %v1724 = vshrl.u32 %v1723, 7
    %v1725 = vsub.s32 0, %v1724
    %v1726 = vrot.slane %v1647, %v1725
    %v1727 = vmul.f32 %v1401, %v1726
    %v1728 = vmul.f32 %v1402, %v1726
    %v1729 = vlaneseq
    %v1730 = vshrl.u32 %v1729, 7
    %v1731 = vsub.s32 0, %v1730
    %v1732 = vrot.slane %v1720, %v1731
    %v1733 = vadd.f32 %v1727, %v1732
    %v1734 = vadd.f32 %v1728, %v1732
    %v1735 = vmax.f32 %v1733, 0.0
    %v1736 = vmax.f32 %v1734, 0.0
    %vm1737 = vcmask 1043456
    %v1738 = vsel %vm1737, %v1735, 0.0
    %v1739 = vrot.slane %v1738, 4
    %v1740 = vadd.f32 %v1738, %v1739
    %v1741 = vrot.slane %v1740, 2
    %v1742 = vadd.f32 %v1740, %v1741
    %v1743 = vrot.slane %v1742, 1
    %v1744 = vadd.f32 %v1742, %v1743
    %v1745 = vsel %vm1737, %v1736, 0.0
    %v1746 = vrot.slane %v1745, 4
    %v1747 = vadd.f32 %v1745, %v1746
    %v1748 = vrot.slane %v1747, 2
    %v1749 = vadd.f32 %v1747, %v1748
    %v1750 = vrot.slane %v1749, 1
    %v1751 = vadd.f32 %v1749, %v1750
    %vm1754 = vcmask 1041409
    %v1755 = vsel %vm1754, %v1751, %v1744
    %1757 = vmatprep.subr.mxu0 0.0
    %1758 = vmatpush1.msra.mxu0 %v807
    %1759 = vmatprep.subr.mxu0 0.0
    %1760 = vmatpush1.msra.mxu0 %v806
    %1761 = vmatprep.subr.mxu0 0.0
    %1762 = vmatpush1.msra.mxu0 %v805
    %1763 = vmatprep.subr.mxu0 0.0
    %1764 = vmatpush1.msra.mxu0 %v804
    %1765 = vmatprep.subr.mxu0 0.0
    %1766 = vmatpush1.msra.mxu0 %v803
    %1767 = vmatprep.subr.mxu0 0.0
    %1768 = vmatpush1.msra.mxu0 %v802
    %1769 = vmatprep.subr.mxu0 0.0
    %1770 = vmatpush1.msra.mxu0 %v801
    %1771 = vmatprep.subr.mxu0 0.0
    %1772 = vmatpush1.msra.mxu0 %v800
    %1773 = vmatprep.subr.mxu0 0.0
    %1774 = vmatpush1.msra.mxu0 %v799
    %1775 = vmatprep.subr.mxu0 0.0
    %1776 = vmatpush1.msra.mxu0 %v798
    %1777 = vmatprep.subr.mxu0 0.0
    %1778 = vmatpush1.msra.mxu0 %v797
    %1779 = vmatprep.subr.mxu0 0.0
    %1780 = vmatpush1.msra.mxu0 %v796
    %1781 = vmatprep.subr.mxu0 0.0
    %1782 = vmatpush1.msra.mxu0 %v795
    %1783 = vmatprep.subr.mxu0 0.0
    %1784 = vmatpush1.msra.mxu0 %v794
    %1785 = vmatprep.subr.mxu0 0.0
    %1786 = vmatpush1.msra.mxu0 %v793
    %1787 = vmatprep.subr.mxu0 0.0
    %1788 = vmatpush1.msra.mxu0 %v792
    %1789 = vmatprep.subr.mxu0 0.0
    %1790 = vmatpush2.msra.mxu0 0.0
    %1791 = vmatprep.subr.mxu0 0.0
    %1792 = vmatpush2.msra.mxu0 0.0
    %1793 = vmatprep.subr.mxu0 0.0
    %1794 = vmatpush2.msra.mxu0 0.0
    %1795 = vmatprep.subr.mxu0 0.0
    %1796 = vmatpush2.msra.mxu0 0.0
    %1797 = vmatprep.subr.mxu0 0.0
    %1798 = vmatpush2.msra.mxu0 0.0
    %1799 = vmatprep.subr.mxu0 0.0
    %1800 = vmatpush2.msra.mxu0 0.0
    %1801 = vmatprep.subr.mxu0 0.0
    %1802 = vmatpush2.msra.mxu0 0.0
    %1803 = vmatprep.subr.mxu0 0.0
    %1804 = vmatpush2.msra.mxu0 0.0
    %1805 = vmatprep.subr.mxu0 0.0
    %1806 = vmatpush2.msra.mxu0 0.0
    %1807 = vmatprep.subr.mxu0 0.0
    %1808 = vmatpush2.msra.mxu0 0.0
    %1809 = vmatprep.subr.mxu0 0.0
    %1810 = vmatpush2.msra.mxu0 0.0
    %1811 = vmatprep.subr.mxu0 0.0
    %1812 = vmatpush2.msra.mxu0 0.0
    %1813 = vmatprep.subr.mxu0 0.0
    %1814 = vmatpush2.msra.mxu0 0.0
    %1815 = vmatprep.subr.mxu0 0.0
    %1816 = vmatpush2.msra.mxu0 0.0
    %1817 = vmatprep.subr.mxu0 0.0
    %1818 = vmatpush2.msra.mxu0 0.0
    %1819 = vmatprep.subr.mxu0 0.0
    %1820 = vmatpush2.msra.mxu0 0.0
    %1821 = vmatprep.mubr.f32.mxu0 0.0
    %1822 = vmatmul.mubr.f32.gmra.mxu0 %v1755
    %v1823 = vpop.f32.mrf.mxu0
    %v1824 = vadd.f32 0.0, %v1823
    %v1825 = vpop.f32.mrf.mxu0
    %1826 = vdwg.mxu0
    %v1827 = vmul.f32 %v1824, 0.015625
    %v1828 = vld [vmem:[%s15] sm:$0xff]
    %v1830 = vsel %vm961, %v1827, 0
    %1832 = vmatprep.subr.mxu0 0.0
    %1833 = vmatpush1.msra.mxu0 0.0
    %1834 = vmatprep.subr.mxu0 0.0
    %1835 = vmatpush1.msra.mxu0 0.0
    %1836 = vmatprep.subr.mxu0 0.0
    %1837 = vmatpush1.msra.mxu0 0.0
    %1838 = vmatprep.subr.mxu0 0.0
    %1839 = vmatpush1.msra.mxu0 0.0
    %1840 = vmatprep.subr.mxu0 0.0
    %1841 = vmatpush1.msra.mxu0 0.0
    %1842 = vmatprep.subr.mxu0 0.0
    %1843 = vmatpush1.msra.mxu0 0.0
    %1844 = vmatprep.subr.mxu0 0.0
    %1845 = vmatpush1.msra.mxu0 0.0
    %1846 = vmatprep.subr.mxu0 0.0
    %1847 = vmatpush1.msra.mxu0 0.0
    %1848 = vmatprep.subr.mxu0 0.0
    %1849 = vmatpush1.msra.mxu0 0.0
    %1850 = vmatprep.subr.mxu0 0.0
    %1851 = vmatpush1.msra.mxu0 0.0
    %1852 = vmatprep.subr.mxu0 0.0
    %1853 = vmatpush1.msra.mxu0 0.0
    %1854 = vmatprep.subr.mxu0 0.0
    %1855 = vmatpush1.msra.mxu0 0.0
    %1856 = vmatprep.subr.mxu0 0.0
    %1857 = vmatpush1.msra.mxu0 0.0
    %1858 = vmatprep.subr.mxu0 0.0
    %1859 = vmatpush1.msra.mxu0 0.0
    %1860 = vmatprep.subr.mxu0 0.0
    %1861 = vmatpush1.msra.mxu0 0.0
    %1862 = vmatprep.subr.mxu0 0.0
    %1863 = vmatpush1.msra.mxu0 %v1828
    %1864 = vmatprep.subr.mxu0 0.0
    %1865 = vmatpush2.msra.mxu0 0.0
    %1866 = vmatprep.subr.mxu0 0.0
    %1867 = vmatpush2.msra.mxu0 0.0
    %1868 = vmatprep.subr.mxu0 0.0
    %1869 = vmatpush2.msra.mxu0 0.0
    %1870 = vmatprep.subr.mxu0 0.0
    %1871 = vmatpush2.msra.mxu0 0.0
    %1872 = vmatprep.subr.mxu0 0.0
    %1873 = vmatpush2.msra.mxu0 0.0
    %1874 = vmatprep.subr.mxu0 0.0
    %1875 = vmatpush2.msra.mxu0 0.0
    %1876 = vmatprep.subr.mxu0 0.0
    %1877 = vmatpush2.msra.mxu0 0.0
    %1878 = vmatprep.subr.mxu0 0.0
    %1879 = vmatpush2.msra.mxu0 0.0
    %1880 = vmatprep.subr.mxu0 0.0
    %1881 = vmatpush2.msra.mxu0 0.0
    %1882 = vmatprep.subr.mxu0 0.0
    %1883 = vmatpush2.msra.mxu0 0.0
    %1884 = vmatprep.subr.mxu0 0.0
    %1885 = vmatpush2.msra.mxu0 0.0
    %1886 = vmatprep.subr.mxu0 0.0
    %1887 = vmatpush2.msra.mxu0 0.0
    %1888 = vmatprep.subr.mxu0 0.0
    %1889 = vmatpush2.msra.mxu0 0.0
    %1890 = vmatprep.subr.mxu0 0.0
    %1891 = vmatpush2.msra.mxu0 0.0
    %1892 = vmatprep.subr.mxu0 0.0
    %1893 = vmatpush2.msra.mxu0 0.0
    %1894 = vmatprep.subr.mxu0 0.0
    %1895 = vmatpush2.msra.mxu0 0.0
    %1896 = vmatprep.mubr.f32.mxu0 0.0
    %1897 = vmatmul.mubr.f32.gmra.mxu0 %v1830
    %v1898 = vpop.f32.mrf.mxu0
    %v1899 = vadd.f32 0.0, %v1898
    %v1900 = vpop.f32.mrf.mxu0
    %1901 = vdwg.mxu0
    %v1902 = vxor.u32 %v1899, 2147483648
    %v1903 = vmul.f32 %v1902, 1.442695
    %v1904 = vpow.pop %v1903
    %v1905 = vadd.f32 %v1904, 1.0
    %v1906 = vrcp.pop %v1905
    %v1907 = vmul.f32 1.0, %v1906
    %v1909 = vsel %vm961, %v1907, 0
    %1911 = vmatprep.subr.mxu0 0.0
    %1912 = vmatpush1.msra.mxu0 0.0
    %1913 = vmatprep.subr.mxu0 0.0
    %1914 = vmatpush1.msra.mxu0 0.0
    %1915 = vmatprep.subr.mxu0 0.0
    %1916 = vmatpush1.msra.mxu0 0.0
    %1917 = vmatprep.subr.mxu0 0.0
    %1918 = vmatpush1.msra.mxu0 0.0
    %1919 = vmatprep.subr.mxu0 0.0
    %1920 = vmatpush1.msra.mxu0 0.0
    %1921 = vmatprep.subr.mxu0 0.0
    %1922 = vmatpush1.msra.mxu0 0.0
    %1923 = vmatprep.subr.mxu0 0.0
    %1924 = vmatpush1.msra.mxu0 0.0
    %1925 = vmatprep.subr.mxu0 0.0
    %1926 = vmatpush1.msra.mxu0 0.0
    %1927 = vmatprep.subr.mxu0 0.0
    %1928 = vmatpush1.msra.mxu0 0.0
    %1929 = vmatprep.subr.mxu0 0.0
    %1930 = vmatpush1.msra.mxu0 0.0
    %1931 = vmatprep.subr.mxu0 0.0
    %1932 = vmatpush1.msra.mxu0 0.0
    %1933 = vmatprep.subr.mxu0 0.0
    %1934 = vmatpush1.msra.mxu0 0.0
    %1935 = vmatprep.subr.mxu0 0.0
    %1936 = vmatpush1.msra.mxu0 0.0
    %1937 = vmatprep.subr.mxu0 0.0
    %1938 = vmatpush1.msra.mxu0 0.0
    %1939 = vmatprep.subr.mxu0 0.0
    %1940 = vmatpush1.msra.mxu0 0.0
    %1941 = vmatprep.subr.mxu0 0.0
    %1942 = vmatpush1.msra.mxu0 %v960
    %1943 = vmatprep.subr.mxu0 0.0
    %1944 = vmatpush2.msra.mxu0 0.0
    %1945 = vmatprep.subr.mxu0 0.0
    %1946 = vmatpush2.msra.mxu0 0.0
    %1947 = vmatprep.subr.mxu0 0.0
    %1948 = vmatpush2.msra.mxu0 0.0
    %1949 = vmatprep.subr.mxu0 0.0
    %1950 = vmatpush2.msra.mxu0 0.0
    %1951 = vmatprep.subr.mxu0 0.0
    %1952 = vmatpush2.msra.mxu0 0.0
    %1953 = vmatprep.subr.mxu0 0.0
    %1954 = vmatpush2.msra.mxu0 0.0
    %1955 = vmatprep.subr.mxu0 0.0
    %1956 = vmatpush2.msra.mxu0 0.0
    %1957 = vmatprep.subr.mxu0 0.0
    %1958 = vmatpush2.msra.mxu0 0.0
    %1959 = vmatprep.subr.mxu0 0.0
    %1960 = vmatpush2.msra.mxu0 0.0
    %1961 = vmatprep.subr.mxu0 0.0
    %1962 = vmatpush2.msra.mxu0 0.0
    %1963 = vmatprep.subr.mxu0 0.0
    %1964 = vmatpush2.msra.mxu0 0.0
    %1965 = vmatprep.subr.mxu0 0.0
    %1966 = vmatpush2.msra.mxu0 0.0
    %1967 = vmatprep.subr.mxu0 0.0
    %1968 = vmatpush2.msra.mxu0 0.0
    %1969 = vmatprep.subr.mxu0 0.0
    %1970 = vmatpush2.msra.mxu0 0.0
    %1971 = vmatprep.subr.mxu0 0.0
    %1972 = vmatpush2.msra.mxu0 0.0
    %1973 = vmatprep.subr.mxu0 0.0
    %1974 = vmatpush2.msra.mxu0 0.0
    %1975 = vmatprep.mubr.f32.mxu0 0.0
    %1976 = vmatmul.mubr.f32.gmra.mxu0 %v1909
    %v1977 = vpop.f32.mrf.mxu0
    %v1978 = vadd.f32 0.0, %v1977
    %v1979 = vpop.f32.mrf.mxu0
    %1980 = vdwg.mxu0
    %v1983 = vunpack.c.l.s4 1966171168
    %v1984 = vunpack.c.0.s8 %v1983
    %v1985 = vlaneseq
    %v1986 = vshrl.u32 %v1985, 7
    %v1987 = vsub.s32 %v1984, %v1986
    %v1988 = vrot.slane %v1978, %v1987
    %v1989 = vcombine.high %v1988, %v1988
    %v1991 = vunpack.c.l.s4 1966171168
    %v1992 = vunpack.c.0.s8 %v1991
    %v1993 = vlaneseq
    %v1994 = vshrl.u32 %v1993, 7
    %v1995 = vsub.s32 %v1992, %v1994
    %v1996 = vrot.slane %v1988, %v1995
    %v1998 = vunpack.c.l.s4 1966171168
    %v1999 = vunpack.c.0.s8 %v1998
    %v2000 = vlaneseq
    %v2001 = vshrl.u32 %v2000, 7
    %v2002 = vsub.s32 %v1999, %v2001
    %v2003 = vrot.slane %v1989, %v2002
    %v2004 = vlaneseq
    %v2005 = vshrl.u32 %v2004, 7
    %v2006 = vsub.s32 0, %v2005
    %v2007 = vrot.slane %v1996, %v2006
    %v2008 = vlaneseq
    %v2009 = vshrl.u32 %v2008, 7
    %v2010 = vsub.s32 0, %v2009
    %v2011 = vrot.slane %v2003, %v2010
    %v2014 = vmul.f32 %v1735, %v2007
    %v2015 = vmul.f32 %v1736, %v2011
    %2016 = vst [vmem:[#allocation8] sm:$0xf] %v2014
    %2017 = vst [vmem:[#allocation8 + $0x4] sm:$0xf] %v2015
    // Predicated region
    $region78: #{tpu_custom_call.1} parent=1 // pred_check
      _
    $region79: #{tpu_custom_call.1} parent=1 // pred_check_branch
      %2019 = sbr.rel (0) target = $region81
    $region80: #{tpu_custom_call.1} parent=1 // pred_region
      %s2021 = ssub.s32 128, 128
      %2022 = vsyncadd [#allocation4], %s2021
      %s2023 = sshll.u32 [#allocation8], 4
      %s2024 = int_to_ptr.vmem [resolvable:$true] %s2023
      %2029 = dma.vmem_to_hbm [thread:$0]  %s2024, 128, %s16, [#allocation4], 64, 64, 4
    $region81: #{tpu_custom_call.1} parent=1 // pred_fallthru
      _
    // Predicated region
    $region82: #{tpu_custom_call.1} parent=1 // pred_check
      _
    $region83: #{tpu_custom_call.1} parent=1 // pred_check_branch
      %2031 = sbr.rel (0) target = $region85
    $region84: #{tpu_custom_call.1} parent=1 // pred_region
      %2032 = dma.done [#allocation4], 128
    $region85: #{tpu_custom_call.1} parent=1 // pred_fallthru
      _
    %2033 = vsyncpa [#allocation3], 1
    %2034 = vsyncpa [#allocation6], 1
    %2035 = vsyncpa [#allocation4], 1

</llo_original>
